<compile_context>
chip_gen: v7x
topology: tpu7x:2x2x1
jax: 0.10.0
libtpu: 0.0.40
codegen_flags: <defaults>
</compile_context>

<pallas_src>
import functools

import jax
import jax.numpy as jnp
from jax.experimental import pallas as pl
from jax.experimental.pallas import tpu as pltpu


def _round_up(x, m):
    return ((x + m - 1) // m) * m


# ---------------------------------------------------------------------------
# Pallas kernel: one batch element -> conv feature slab + downsampled mask
# ---------------------------------------------------------------------------

def _backbone_stage_kernel(xph_ref, w_ref, b_ref, m_ref, feat_ref, mask_ref,
                           *, wp):
    """Fused 3x3/stride-2 conv (9-tap MXU accumulation) + mask pass-through.

    xph_ref : (2, 2, F, C)  bf16  stride-2 phases of the zero-padded input,
                                  spatial dims pre-flattened (F = Hp*Wp)
    w_ref   : (3, 3, C, Nc) bf16  conv taps, C_out zero-padded to Nc (mult. of 128)
    b_ref   : (1, Nc)       f32   bias row (zero-padded)
    m_ref   : (Ho, Wo)      f32   nearest-selected mask (picked via BlockSpec)
    feat_ref: (L, Nc)       f32   wide output slab, L = Ho*Wp (halo column is
                                  garbage and gets sliced off in the wrapper)
    mask_ref: (Ho, Wo)      f32
    """
    L, Nc = feat_ref.shape

    # Start from the bias so no extra full-slab add is needed at the end.
    acc = jnp.broadcast_to(b_ref[...], (L, Nc)).astype(jnp.float32)

    # 9 taps, statically unrolled.  Tap (di, dj) lives in phase
    # (di % 2, dj % 2); within that phase its window starts at flat row
    # (di // 2) * Wp + (dj // 2).  Each read is a contiguous 2-D slice.
    for di in range(3):
        for dj in range(3):
            start = (di // 2) * wp + (dj // 2)
            xs = xph_ref[di % 2, dj % 2, pl.ds(start, L), :]      # (L, C) bf16
            acc = acc + jnp.dot(xs, w_ref[di, dj],
                                preferred_element_type=jnp.float32)

    feat_ref[...] = acc
    mask_ref[...] = m_ref[...]   # nearest selection already done by index map


# ---------------------------------------------------------------------------
# Wrapper: layout plumbing + pallas_call
# ---------------------------------------------------------------------------

def backbone_stage_forward(x_nchw, w_taps, b_row, mask_bool, num_channels):
    """Returns (features NCHW f32, downsampled bool mask) — PyTorch semantics."""
    B, C, H, W = x_nchw.shape
    Nc = w_taps.shape[-1]
    Ho = (H - 1) // 2 + 1            # conv: 3x3, stride 2, pad 1
    Wo = (W - 1) // 2 + 1
    Hp = Ho + 2                      # phase-grid rows (halo + slack so every
    Wp = Wo + 1                      # tap reads a uniform in-bounds window)
    F = Hp * Wp                      # flattened phase spatial extent
    L = Ho * Wp                      # rows of the wide output slab

    # --- input: NHWC bf16, zero-pad, stride-2 phase split, flatten (1x data) ---
    x = jnp.transpose(x_nchw, (0, 2, 3, 1)).astype(jnp.bfloat16)
    x = jnp.pad(x, ((0, 0), (1, 2 * Hp - H - 1), (1, 2 * Wp - W - 1), (0, 0)))
    xph = x.reshape(B, Hp, 2, Wp, 2, C).transpose(0, 2, 4, 1, 3, 5)
    xph = xph.reshape(B, 2, 2, F, C)             # (B, 2, 2, F, C)

    # --- mask: PyTorch nearest = floor(dst * in/out).  Integer scale -> phase (0,0) ---
    mask_f = mask_bool.astype(jnp.float32)
    if H % Ho == 0 and W % Wo == 0:
        sh, sw = H // Ho, W // Wo
        mph = mask_f.reshape(B, Ho, sh, Wo, sw).transpose(0, 2, 4, 1, 3)  # (B,sh,sw,Ho,Wo)
    else:
        # TODO(synk): non-integer nearest scale falls back to an XLA static gather.
        idx_h = jnp.asarray([min(int(i * H / Ho), H - 1) for i in range(Ho)])
        idx_w = jnp.asarray([min(int(j * W / Wo), W - 1) for j in range(Wo)])
        mph = mask_f[:, idx_h][:, :, idx_w].reshape(B, 1, 1, Ho, Wo)

    kernel = functools.partial(_backbone_stage_kernel, wp=Wp)

    feat_wide, mask_out_f = pl.pallas_call(
        kernel,
        out_shape=(
            jax.ShapeDtypeStruct((B, L, Nc), jnp.float32),
            jax.ShapeDtypeStruct((B, Ho, Wo), jnp.float32),
        ),
        grid_spec=pltpu.PrefetchScalarGridSpec(
            num_scalar_prefetch=0,
            grid=(B,),
            in_specs=[
                # full phase slab for batch b (batch dim squeezed)
                pl.BlockSpec((None, 2, 2, F, C), lambda b: (b, 0, 0, 0, 0)),
                # weights / bias resident across the grid (constant block index)
                pl.BlockSpec((3, 3, C, Nc), lambda b: (0, 0, 0, 0)),
                pl.BlockSpec((1, Nc), lambda b: (0, 0)),
                # mask: only phase (0,0) of batch b is ever DMA'd
                pl.BlockSpec((None, None, None, Ho, Wo),
                             lambda b: (b, 0, 0, 0, 0)),
            ],
            out_specs=(
                pl.BlockSpec((None, L, Nc), lambda b: (b, 0, 0)),
                pl.BlockSpec((None, Ho, Wo), lambda b: (b, 0, 0)),
            ),
        ),
        compiler_params=pltpu.CompilerParams(
            dimension_semantics=("parallel",)),
    )(xph, w_taps, b_row, mph)

    # Slice off the halo column + channel padding; return NCHW like PyTorch.
    feat = feat_wide.reshape(B, Ho, Wp, Nc)[:, :, :Wo, :num_channels]
    feat = jnp.transpose(feat, (0, 3, 1, 2))
    return feat, mask_out_f > 0.5


class BackboneBasePallas:
    """JAX/Pallas counterpart of BackboneBase.

    `body` is a synthetic single-layer backbone (3x3 stride-2 conv) returning
    {'0': feature_map}; weights are deterministic (PRNGKey-derived).
    """
    # TODO(synk): the real `self.body` is an arbitrary nn.Module (ResNet);
    # only a representative single conv stage is implemented here.

    def __init__(self, in_channels: int, num_channels: int, key):
        k1, k2 = jax.random.split(key)
        self.num_channels = num_channels
        fan_in = in_channels * 9
        self.weight = (jax.random.normal(
            k1, (num_channels, in_channels, 3, 3), jnp.float32)
            / jnp.sqrt(jnp.float32(fan_in)))                       # OIHW (PyTorch)
        self.bias = 0.01 * jax.random.normal(k2, (num_channels,), jnp.float32)

        # Kernel-friendly layouts: (kh, kw, C, Nc) bf16 taps, lane-dense C_out.
        Nc = _round_up(num_channels, 128)
        w_taps = jnp.transpose(self.weight, (2, 3, 1, 0))          # (3,3,C,N)
        self.w_taps = jnp.pad(
            w_taps, ((0, 0), (0, 0), (0, 0), (0, Nc - num_channels))
        ).astype(jnp.bfloat16)
        self.b_row = jnp.pad(self.bias, (0, Nc - num_channels)).reshape(1, Nc)

    def __call__(self, tensors, mask):
        # xs = self.body(tensor_list.tensors); mask = F.interpolate(...).to(bool)
        feat, m_out = backbone_stage_forward(
            tensors, self.w_taps, self.b_row, mask, self.num_channels)
        return {"0": (feat, m_out)}   # NestedTensor(x, mask)


# ---------------------------------------------------------------------------
# main
# ---------------------------------------------------------------------------

if __name__ == "__main__":
    key = jax.random.PRNGKey(0)
    kx, km, kp = jax.random.split(key, 3)

    B, C, H, W = 2, 4, 16, 16
    NUM_CHANNELS = 8

    x = jax.random.normal(kx, (B, C, H, W), jnp.float32)          # NCHW
    mask = jax.random.bernoulli(km, 0.3, (B, H, W))                # bool padding mask

    backbone = BackboneBasePallas(C, NUM_CHANNELS, kp)
    out = backbone(x, mask)
    feat, feat_mask = out["0"]
    jax.block_until_ready(feat)
    jax.block_until_ready(feat_mask)

    # ---- reference check (pure JAX / XLA) ----
    # Kernel computes with bf16 operands + f32 accumulation, so the reference
    # uses the same bf16-rounded operands.
    xq = x.astype(jnp.bfloat16).astype(jnp.float32)
    wq = backbone.weight.astype(jnp.bfloat16).astype(jnp.float32)
    ref_feat = jax.lax.conv_general_dilated(
        xq, wq, window_strides=(2, 2), padding=((1, 1), (1, 1)),
        dimension_numbers=("NCHW", "OIHW", "NCHW"),
    ) + backbone.bias[None, :, None, None]

    Ho, Wo = feat.shape[-2:]
    idx_h = jnp.asarray([min(int(i * H / Ho), H - 1) for i in range(Ho)])
    idx_w = jnp.asarray([min(int(j * W / Wo), W - 1) for j in range(Wo)])
    ref_mask = mask[:, idx_h][:, :, idx_w]

    assert feat.shape == (B, NUM_CHANNELS, Ho, Wo) and feat.dtype == jnp.float32
    assert feat_mask.shape == (B, Ho, Wo) and feat_mask.dtype == jnp.bool_
    assert jnp.allclose(feat, ref_feat, atol=2e-3, rtol=2e-3)
    assert bool(jnp.all(feat_mask == ref_mask))

    print("KERNEL_OK")
</pallas_src>

<mosaic_0001>
module attributes {stable_mosaic.version = 11 : i64} {
  func.func @_backbone_stage_kernel(%arg0: i32, %arg1: memref<1x2x2x90x4xbf16, #tpu.memory_space<vmem>>, %arg2: memref<3x3x4x128xbf16, #tpu.memory_space<vmem>>, %arg3: memref<1x128xf32, #tpu.memory_space<vmem>>, %arg4: memref<1x1x1x8x8xf32, #tpu.memory_space<vmem>>, %arg5: memref<1x72x128xf32, #tpu.memory_space<vmem>>, %arg6: memref<1x8x8xf32, #tpu.memory_space<vmem>>) attributes {dimension_semantics = [#tpu.dimension_semantics<parallel>], iteration_bounds = array<i64: 2>, scalar_prefetch = 0 : i64, scratch_operands = 0 : i64, tpu.core_type = #tpu.core_type<tc>, window_params = [{transform_indices = @transform_0, window_bounds = array<i64: 1, 2, 2, 90, 4>}, {pipeline_mode = #tpu.pipeline_mode<synchronous>, transform_indices = @transform_1, window_bounds = array<i64: 3, 3, 4, 128>}, {pipeline_mode = #tpu.pipeline_mode<synchronous>, transform_indices = @transform_2, window_bounds = array<i64: 1, 128>}, {transform_indices = @transform_3, window_bounds = array<i64: 1, 1, 1, 8, 8>}, {transform_indices = @transform_4, window_bounds = array<i64: 1, 72, 128>}, {transform_indices = @transform_5, window_bounds = array<i64: 1, 8, 8>}]} {
    %c0 = arith.constant 0 : index
    %c0_0 = arith.constant 0 : index
    %0 = vector.load %arg3[%c0, %c0_0] : memref<1x128xf32, #tpu.memory_space<vmem>>, vector<1x128xf32>
    %1 = vector.shape_cast %0 : vector<1x128xf32> to vector<1x128xf32>
    %2 = vector.broadcast %1 : vector<1x128xf32> to vector<72x128xf32>
    %c0_1 = arith.constant 0 : index
    %c0_2 = arith.constant 0 : index
    %c0_3 = arith.constant 0 : index
    %c0_4 = arith.constant 0 : index
    %c0_5 = arith.constant 0 : index
    %3 = vector.load %arg1[%c0_1, %c0_2, %c0_3, %c0_4, %c0_5] : memref<1x2x2x90x4xbf16, #tpu.memory_space<vmem>>, vector<1x1x1x72x4xbf16>
    %4 = vector.shape_cast %3 : vector<1x1x1x72x4xbf16> to vector<72x4xbf16>
    %c0_6 = arith.constant 0 : index
    %c0_7 = arith.constant 0 : index
    %c0_8 = arith.constant 0 : index
    %c0_9 = arith.constant 0 : index
    %5 = vector.load %arg2[%c0_6, %c0_7, %c0_8, %c0_9] : memref<3x3x4x128xbf16, #tpu.memory_space<vmem>>, vector<1x1x4x128xbf16>
    %6 = vector.shape_cast %5 : vector<1x1x4x128xbf16> to vector<4x128xbf16>
    %cst = arith.constant dense<0.000000e+00> : vector<72x128xf32>
    %7 = tpu.matmul %4, %6, %cst {dimension_numbers = #tpu.dot_dimension_numbers<[1], [0], [0], [1], [0, 0, 1, 1], [], []>} : vector<72x4xbf16>, vector<4x128xbf16>, vector<72x128xf32> -> vector<72x128xf32>
    %8 = arith.addf %2, %7 : vector<72x128xf32>
    %c0_10 = arith.constant 0 : index
    %c0_11 = arith.constant 0 : index
    %c1 = arith.constant 1 : index
    %c0_12 = arith.constant 0 : index
    %c0_13 = arith.constant 0 : index
    %9 = vector.load %arg1[%c0_10, %c0_11, %c1, %c0_12, %c0_13] : memref<1x2x2x90x4xbf16, #tpu.memory_space<vmem>>, vector<1x1x1x72x4xbf16>
    %10 = vector.shape_cast %9 : vector<1x1x1x72x4xbf16> to vector<72x4xbf16>
    %c0_14 = arith.constant 0 : index
    %c1_15 = arith.constant 1 : index
    %c0_16 = arith.constant 0 : index
    %c0_17 = arith.constant 0 : index
    %11 = vector.load %arg2[%c0_14, %c1_15, %c0_16, %c0_17] : memref<3x3x4x128xbf16, #tpu.memory_space<vmem>>, vector<1x1x4x128xbf16>
    %12 = vector.shape_cast %11 : vector<1x1x4x128xbf16> to vector<4x128xbf16>
    %cst_18 = arith.constant dense<0.000000e+00> : vector<72x128xf32>
    %13 = tpu.matmul %10, %12, %cst_18 {dimension_numbers = #tpu.dot_dimension_numbers<[1], [0], [0], [1], [0, 0, 1, 1], [], []>} : vector<72x4xbf16>, vector<4x128xbf16>, vector<72x128xf32> -> vector<72x128xf32>
    %14 = arith.addf %8, %13 : vector<72x128xf32>
    %c0_19 = arith.constant 0 : index
    %c0_20 = arith.constant 0 : index
    %c0_21 = arith.constant 0 : index
    %c1_22 = arith.constant 1 : index
    %c0_23 = arith.constant 0 : index
    %15 = vector.load %arg1[%c0_19, %c0_20, %c0_21, %c1_22, %c0_23] : memref<1x2x2x90x4xbf16, #tpu.memory_space<vmem>>, vector<1x1x1x72x4xbf16>
    %16 = vector.shape_cast %15 : vector<1x1x1x72x4xbf16> to vector<72x4xbf16>
    %c0_24 = arith.constant 0 : index
    %c2 = arith.constant 2 : index
    %c0_25 = arith.constant 0 : index
    %c0_26 = arith.constant 0 : index
    %17 = vector.load %arg2[%c0_24, %c2, %c0_25, %c0_26] : memref<3x3x4x128xbf16, #tpu.memory_space<vmem>>, vector<1x1x4x128xbf16>
    %18 = vector.shape_cast %17 : vector<1x1x4x128xbf16> to vector<4x128xbf16>
    %cst_27 = arith.constant dense<0.000000e+00> : vector<72x128xf32>
    %19 = tpu.matmul %16, %18, %cst_27 {dimension_numbers = #tpu.dot_dimension_numbers<[1], [0], [0], [1], [0, 0, 1, 1], [], []>} : vector<72x4xbf16>, vector<4x128xbf16>, vector<72x128xf32> -> vector<72x128xf32>
    %20 = arith.addf %14, %19 : vector<72x128xf32>
    %c0_28 = arith.constant 0 : index
    %c1_29 = arith.constant 1 : index
    %c0_30 = arith.constant 0 : index
    %c0_31 = arith.constant 0 : index
    %c0_32 = arith.constant 0 : index
    %21 = vector.load %arg1[%c0_28, %c1_29, %c0_30, %c0_31, %c0_32] : memref<1x2x2x90x4xbf16, #tpu.memory_space<vmem>>, vector<1x1x1x72x4xbf16>
    %22 = vector.shape_cast %21 : vector<1x1x1x72x4xbf16> to vector<72x4xbf16>
    %c1_33 = arith.constant 1 : index
    %c0_34 = arith.constant 0 : index
    %c0_35 = arith.constant 0 : index
    %c0_36 = arith.constant 0 : index
    %23 = vector.load %arg2[%c1_33, %c0_34, %c0_35, %c0_36] : memref<3x3x4x128xbf16, #tpu.memory_space<vmem>>, vector<1x1x4x128xbf16>
    %24 = vector.shape_cast %23 : vector<1x1x4x128xbf16> to vector<4x128xbf16>
    %cst_37 = arith.constant dense<0.000000e+00> : vector<72x128xf32>
    %25 = tpu.matmul %22, %24, %cst_37 {dimension_numbers = #tpu.dot_dimension_numbers<[1], [0], [0], [1], [0, 0, 1, 1], [], []>} : vector<72x4xbf16>, vector<4x128xbf16>, vector<72x128xf32> -> vector<72x128xf32>
    %26 = arith.addf %20, %25 : vector<72x128xf32>
    %c0_38 = arith.constant 0 : index
    %c1_39 = arith.constant 1 : index
    %c1_40 = arith.constant 1 : index
    %c0_41 = arith.constant 0 : index
    %c0_42 = arith.constant 0 : index
    %27 = vector.load %arg1[%c0_38, %c1_39, %c1_40, %c0_41, %c0_42] : memref<1x2x2x90x4xbf16, #tpu.memory_space<vmem>>, vector<1x1x1x72x4xbf16>
    %28 = vector.shape_cast %27 : vector<1x1x1x72x4xbf16> to vector<72x4xbf16>
    %c1_43 = arith.constant 1 : index
    %c1_44 = arith.constant 1 : index
    %c0_45 = arith.constant 0 : index
    %c0_46 = arith.constant 0 : index
    %29 = vector.load %arg2[%c1_43, %c1_44, %c0_45, %c0_46] : memref<3x3x4x128xbf16, #tpu.memory_space<vmem>>, vector<1x1x4x128xbf16>
    %30 = vector.shape_cast %29 : vector<1x1x4x128xbf16> to vector<4x128xbf16>
    %cst_47 = arith.constant dense<0.000000e+00> : vector<72x128xf32>
    %31 = tpu.matmul %28, %30, %cst_47 {dimension_numbers = #tpu.dot_dimension_numbers<[1], [0], [0], [1], [0, 0, 1, 1], [], []>} : vector<72x4xbf16>, vector<4x128xbf16>, vector<72x128xf32> -> vector<72x128xf32>
    %32 = arith.addf %26, %31 : vector<72x128xf32>
    %c0_48 = arith.constant 0 : index
    %c1_49 = arith.constant 1 : index
    %c0_50 = arith.constant 0 : index
    %c1_51 = arith.constant 1 : index
    %c0_52 = arith.constant 0 : index
    %33 = vector.load %arg1[%c0_48, %c1_49, %c0_50, %c1_51, %c0_52] : memref<1x2x2x90x4xbf16, #tpu.memory_space<vmem>>, vector<1x1x1x72x4xbf16>
    %34 = vector.shape_cast %33 : vector<1x1x1x72x4xbf16> to vector<72x4xbf16>
    %c1_53 = arith.constant 1 : index
    %c2_54 = arith.constant 2 : index
    %c0_55 = arith.constant 0 : index
    %c0_56 = arith.constant 0 : index
    %35 = vector.load %arg2[%c1_53, %c2_54, %c0_55, %c0_56] : memref<3x3x4x128xbf16, #tpu.memory_space<vmem>>, vector<1x1x4x128xbf16>
    %36 = vector.shape_cast %35 : vector<1x1x4x128xbf16> to vector<4x128xbf16>
    %cst_57 = arith.constant dense<0.000000e+00> : vector<72x128xf32>
    %37 = tpu.matmul %34, %36, %cst_57 {dimension_numbers = #tpu.dot_dimension_numbers<[1], [0], [0], [1], [0, 0, 1, 1], [], []>} : vector<72x4xbf16>, vector<4x128xbf16>, vector<72x128xf32> -> vector<72x128xf32>
    %38 = arith.addf %32, %37 : vector<72x128xf32>
    %c0_58 = arith.constant 0 : index
    %c0_59 = arith.constant 0 : index
    %c0_60 = arith.constant 0 : index
    %c9 = arith.constant 9 : index
    %c0_61 = arith.constant 0 : index
    %39 = vector.load %arg1[%c0_58, %c0_59, %c0_60, %c9, %c0_61] : memref<1x2x2x90x4xbf16, #tpu.memory_space<vmem>>, vector<1x1x1x72x4xbf16>
    %40 = vector.shape_cast %39 : vector<1x1x1x72x4xbf16> to vector<72x4xbf16>
    %c2_62 = arith.constant 2 : index
    %c0_63 = arith.constant 0 : index
    %c0_64 = arith.constant 0 : index
    %c0_65 = arith.constant 0 : index
    %41 = vector.load %arg2[%c2_62, %c0_63, %c0_64, %c0_65] : memref<3x3x4x128xbf16, #tpu.memory_space<vmem>>, vector<1x1x4x128xbf16>
    %42 = vector.shape_cast %41 : vector<1x1x4x128xbf16> to vector<4x128xbf16>
    %cst_66 = arith.constant dense<0.000000e+00> : vector<72x128xf32>
    %43 = tpu.matmul %40, %42, %cst_66 {dimension_numbers = #tpu.dot_dimension_numbers<[1], [0], [0], [1], [0, 0, 1, 1], [], []>} : vector<72x4xbf16>, vector<4x128xbf16>, vector<72x128xf32> -> vector<72x128xf32>
    %44 = arith.addf %38, %43 : vector<72x128xf32>
    %c0_67 = arith.constant 0 : index
    %c0_68 = arith.constant 0 : index
    %c1_69 = arith.constant 1 : index
    %c9_70 = arith.constant 9 : index
    %c0_71 = arith.constant 0 : index
    %45 = vector.load %arg1[%c0_67, %c0_68, %c1_69, %c9_70, %c0_71] : memref<1x2x2x90x4xbf16, #tpu.memory_space<vmem>>, vector<1x1x1x72x4xbf16>
    %46 = vector.shape_cast %45 : vector<1x1x1x72x4xbf16> to vector<72x4xbf16>
    %c2_72 = arith.constant 2 : index
    %c1_73 = arith.constant 1 : index
    %c0_74 = arith.constant 0 : index
    %c0_75 = arith.constant 0 : index
    %47 = vector.load %arg2[%c2_72, %c1_73, %c0_74, %c0_75] : memref<3x3x4x128xbf16, #tpu.memory_space<vmem>>, vector<1x1x4x128xbf16>
    %48 = vector.shape_cast %47 : vector<1x1x4x128xbf16> to vector<4x128xbf16>
    %cst_76 = arith.constant dense<0.000000e+00> : vector<72x128xf32>
    %49 = tpu.matmul %46, %48, %cst_76 {dimension_numbers = #tpu.dot_dimension_numbers<[1], [0], [0], [1], [0, 0, 1, 1], [], []>} : vector<72x4xbf16>, vector<4x128xbf16>, vector<72x128xf32> -> vector<72x128xf32>
    %50 = arith.addf %44, %49 : vector<72x128xf32>
    %c0_77 = arith.constant 0 : index
    %c0_78 = arith.constant 0 : index
    %c0_79 = arith.constant 0 : index
    %c10 = arith.constant 10 : index
    %c0_80 = arith.constant 0 : index
    %51 = vector.load %arg1[%c0_77, %c0_78, %c0_79, %c10, %c0_80] : memref<1x2x2x90x4xbf16, #tpu.memory_space<vmem>>, vector<1x1x1x72x4xbf16>
    %52 = vector.shape_cast %51 : vector<1x1x1x72x4xbf16> to vector<72x4xbf16>
    %c2_81 = arith.constant 2 : index
    %c2_82 = arith.constant 2 : index
    %c0_83 = arith.constant 0 : index
    %c0_84 = arith.constant 0 : index
    %53 = vector.load %arg2[%c2_81, %c2_82, %c0_83, %c0_84] : memref<3x3x4x128xbf16, #tpu.memory_space<vmem>>, vector<1x1x4x128xbf16>
    %54 = vector.shape_cast %53 : vector<1x1x4x128xbf16> to vector<4x128xbf16>
    %cst_85 = arith.constant dense<0.000000e+00> : vector<72x128xf32>
    %55 = tpu.matmul %52, %54, %cst_85 {dimension_numbers = #tpu.dot_dimension_numbers<[1], [0], [0], [1], [0, 0, 1, 1], [], []>} : vector<72x4xbf16>, vector<4x128xbf16>, vector<72x128xf32> -> vector<72x128xf32>
    %56 = arith.addf %50, %55 : vector<72x128xf32>
    %c0_86 = arith.constant 0 : index
    %c0_87 = arith.constant 0 : index
    %c0_88 = arith.constant 0 : index
    %57 = vector.load %arg5[%c0_86, %c0_87, %c0_88] : memref<1x72x128xf32, #tpu.memory_space<vmem>>, vector<1x72x128xf32>
    %58 = vector.shape_cast %57 : vector<1x72x128xf32> to vector<72x128xf32>
    %59 = vector.shape_cast %56 : vector<72x128xf32> to vector<1x72x128xf32>
    tpu.vector_store %arg5[%c0_86, %c0_87, %c0_88], %59 {strides = array<i32>} : memref<1x72x128xf32, #tpu.memory_space<vmem>>, vector<1x72x128xf32>,
    %c0_89 = arith.constant 0 : index
    %c0_90 = arith.constant 0 : index
    %c0_91 = arith.constant 0 : index
    %c0_92 = arith.constant 0 : index
    %c0_93 = arith.constant 0 : index
    %60 = vector.load %arg4[%c0_89, %c0_90, %c0_91, %c0_92, %c0_93] : memref<1x1x1x8x8xf32, #tpu.memory_space<vmem>>, vector<1x1x1x8x8xf32>
    %61 = vector.shape_cast %60 : vector<1x1x1x8x8xf32> to vector<8x8xf32>
    %c0_94 = arith.constant 0 : index
    %c0_95 = arith.constant 0 : index
    %c0_96 = arith.constant 0 : index
    %62 = vector.load %arg6[%c0_94, %c0_95, %c0_96] : memref<1x8x8xf32, #tpu.memory_space<vmem>>, vector<1x8x8xf32>
    %63 = vector.shape_cast %62 : vector<1x8x8xf32> to vector<8x8xf32>
    %64 = vector.shape_cast %61 : vector<8x8xf32> to vector<1x8x8xf32>
    tpu.vector_store %arg6[%c0_94, %c0_95, %c0_96], %64 {strides = array<i32>} : memref<1x8x8xf32, #tpu.memory_space<vmem>>, vector<1x8x8xf32>,
    return
  }
  func.func @transform_0(%arg0: i32) -> (i32, i32, i32, i32, i32) {
    %c0_i32 = arith.constant 0 : i32
    %c0_i32_0 = arith.constant 0 : i32
    %c0_i32_1 = arith.constant 0 : i32
    %c0_i32_2 = arith.constant 0 : i32
    %c0_i32_3 = arith.constant 0 : i32
    return %arg0, %c0_i32, %c0_i32_0, %c0_i32_1, %c0_i32_2 : i32, i32, i32, i32, i32
  }
  func.func @transform_1(%arg0: i32) -> (i32, i32, i32, i32) {
    %c0_i32 = arith.constant 0 : i32
    %c0_i32_0 = arith.constant 0 : i32
    %c0_i32_1 = arith.constant 0 : i32
    %c0_i32_2 = arith.constant 0 : i32
    %c0_i32_3 = arith.constant 0 : i32
    return %c0_i32, %c0_i32_0, %c0_i32_1, %c0_i32_2 : i32, i32, i32, i32
  }
  func.func @transform_2(%arg0: i32) -> (i32, i32) {
    %c0_i32 = arith.constant 0 : i32
    %c0_i32_0 = arith.constant 0 : i32
    %c0_i32_1 = arith.constant 0 : i32
    return %c0_i32, %c0_i32_0 : i32, i32
  }
  func.func @transform_3(%arg0: i32) -> (i32, i32, i32, i32, i32) {
    %c0_i32 = arith.constant 0 : i32
    %c0_i32_0 = arith.constant 0 : i32
    %c0_i32_1 = arith.constant 0 : i32
    %c0_i32_2 = arith.constant 0 : i32
    %c0_i32_3 = arith.constant 0 : i32
    return %arg0, %c0_i32, %c0_i32_0, %c0_i32_1, %c0_i32_2 : i32, i32, i32, i32, i32
  }
  func.func @transform_4(%arg0: i32) -> (i32, i32, i32) {
    %c0_i32 = arith.constant 0 : i32
    %c0_i32_0 = arith.constant 0 : i32
    %c0_i32_1 = arith.constant 0 : i32
    return %arg0, %c0_i32, %c0_i32_0 : i32, i32, i32
  }
  func.func @transform_5(%arg0: i32) -> (i32, i32, i32) {
    %c0_i32 = arith.constant 0 : i32
    %c0_i32_0 = arith.constant 0 : i32
    %c0_i32_1 = arith.constant 0 : i32
    return %arg0, %c0_i32, %c0_i32_0 : i32, i32, i32
  }
}

</mosaic_0001>

<llo_original>
// kernel: tpu_custom_call.1
$region0: #{tpu_custom_call.1}
  #allocation0 [shape = 'u32[]', space=smem, size = 0x4, offset = 0x4, fixed_abs, tag = 'smem constant byte address 0x4 - core index']
  #allocation1 [shape = 'u32[144,128]{1,0:T(1,128)}', space=vmem, size = 0x12000, scoped, tag = 'internal scratch']
  %s0 = inlined_call_operand.vmem [shape: bf16[2,2,2,90,4], index: 0, kind: input, shape index: {}]
  %s1 = inlined_call_operand.vmem [shape: bf16[3,3,4,128], index: 1, kind: input, shape index: {}]
  %s2 = inlined_call_operand.vmem [shape: f32[1,128], index: 2, kind: input, shape index: {}]
  %s3 = inlined_call_operand.vmem [shape: f32[2,2,2,8,8], index: 3, kind: input, shape index: {}]
  %s4 = inlined_call_operand.hbm [shape: f32[2,72,128], index: 4, kind: output, shape index: {0}]
  %s5 = inlined_call_operand.hbm [shape: f32[2,8,8], index: 5, kind: output, shape index: {1}]
  %6 = xla_tuple %s4, %s5
  %s7 = sld [smem:[#allocation0]]
  $region57: #{tpu_custom_call.1} parent=0
    _
  %s9 = ssub.s32 1, %s7
  %s10 = scalar_select 0, %s9, %s7
  $region1: #{tpu_custom_call.1} parent=0
    #allocation2 [shape = 'u8[73728]{0}', space=vmem, size = 0x12000, scoped, tag = 'output window, operand 0']
    #allocation3 [shape = 's32[2]{0}', space=sflag, size = 0x8, scoped, tag = 'scoped memory for tpu_custom_call.1']
    #allocation4 [shape = 'u8[8192]{0}', space=vmem, size = 0x2000, scoped, tag = 'output window, operand 1']
    #allocation5 [shape = 's32[2]{0}', space=sflag, size = 0x8, scoped, tag = 'scoped memory for tpu_custom_call.1']
    %11 = vsyncpa [#allocation3], 0
    %s12 = scalar_lea.sflag [#allocation3], 1
    %13 = vsyncpa %s12, 0
    %14 = vsyncpa [#allocation5], 0
    %s15 = scalar_lea.sflag [#allocation5], 1
    %16 = vsyncpa %s15, 0
    loop: start=0, step=1, limit=4
    $region2: #{tpu_custom_call.1} parent=1 // loop_pre_header
      _
    $region3: #{tpu_custom_call.1} parent=1 // loop_header
      %s18 = sphi 0, %s22
      %p19 = scmp.ge.s32.totalorder %s18, 4
      %s28 = sphi 0, %s30
      %s31 = sphi 0, %s28
      %s32 = sphi 0, %s31
      %s48 = sphi 0, %s32
      %s52 = sphi 0, %s52
      %s54 = sphi 0, %s52
      %s55 = sphi 0, %s54
      %s69 = sphi 0, %s55
      %s73 = sphi 0, %s73
      %s75 = sphi 0, %s73
      %s76 = sphi 0, %s75
      %s90 = sphi 0, %s76
      %s96 = sphi 0, %s98
      %s99 = sphi 0, %s96
      %s100 = sphi 0, %s99
      %s116 = sphi 0, %s100
      %s122 = sphi 0, %s124
      %s125 = sphi 0, %s122
      %s126 = sphi 0, %s125
      %s142 = sphi 0, %s126
      %s148 = sphi 0, %s150
      %s151 = sphi 0, %s148
      %s152 = sphi 0, %s151
      %s168 = sphi 0, %s152
    $region4: #{tpu_custom_call.1} parent=1 // loop_header_branch
      %21 = sbr.rel (%p19) target = $region8
    $region5: #{tpu_custom_call.1} parent=1 // loop_body
      %s23 = ssub.s32 %s18, 1
      %s24 = ssub.s32 %s18, 2
      %s25 = sadd.s32 %s18, 1
      %s26 = ssub.s32 %s18, %s25
      %p27 = scmp.eq.s32.totalorder %s26, 0
      %s29 = sadd.s32 %s28, 1
      %s30 = scalar_select %p27, %s28, %s29
      %p33 = pneg %p27
      %p34 = scmp.eq.s32.totalorder %s18, 1
      %p35 = por %p33, %p34
      %p36 = scmp.ne.s32.totalorder %s28, %s31
      %p37 = scmp.eq.s32.totalorder %s18, 0
      %p38 = por %p36, %p37
      %p39 = scmp.ne.s32.totalorder %s28, %s31
      %p40 = scmp.eq.s32.totalorder %s23, 1
      %p41 = por %p39, %p40
      %p42 = scmp.ne.s32.totalorder %s31, %s32
      %p43 = scmp.eq.s32.totalorder %s23, 0
      %p44 = por %p42, %p43
      %p45 = scmp.ne.s32.totalorder %s31, %s32
      %p46 = scmp.eq.s32.totalorder %s24, 1
      %p47 = por %p45, %p46
      %p49 = scmp.ne.s32.totalorder %s32, %s48
      %p50 = scmp.eq.s32.totalorder %s24, 0
      %p51 = por %p49, %p50
      %s53 = sadd.s32 %s52, 1
      %p56 = scmp.eq.s32.totalorder %s18, 1
      %p57 = scmp.ne.s32.totalorder %s52, %s54
      %p58 = scmp.eq.s32.totalorder %s18, 0
      %p59 = por %p57, %p58
      %p60 = scmp.ne.s32.totalorder %s52, %s54
      %p61 = scmp.eq.s32.totalorder %s23, 1
      %p62 = por %p60, %p61
      %p63 = scmp.ne.s32.totalorder %s54, %s55
      %p64 = scmp.eq.s32.totalorder %s23, 0
      %p65 = por %p63, %p64
      %p66 = scmp.ne.s32.totalorder %s54, %s55
      %p67 = scmp.eq.s32.totalorder %s24, 1
      %p68 = por %p66, %p67
      %p70 = scmp.ne.s32.totalorder %s55, %s69
      %p71 = scmp.eq.s32.totalorder %s24, 0
      %p72 = por %p70, %p71
      %s74 = sadd.s32 %s73, 1
      %p77 = scmp.eq.s32.totalorder %s18, 1
      %p78 = scmp.ne.s32.totalorder %s73, %s75
      %p79 = scmp.eq.s32.totalorder %s18, 0
      %p80 = por %p78, %p79
      %p81 = scmp.ne.s32.totalorder %s73, %s75
      %p82 = scmp.eq.s32.totalorder %s23, 1
      %p83 = por %p81, %p82
      %p84 = scmp.ne.s32.totalorder %s75, %s76
      %p85 = scmp.eq.s32.totalorder %s23, 0
      %p86 = por %p84, %p85
      %p87 = scmp.ne.s32.totalorder %s75, %s76
      %p88 = scmp.eq.s32.totalorder %s24, 1
      %p89 = por %p87, %p88
      %p91 = scmp.ne.s32.totalorder %s76, %s90
      %p92 = scmp.eq.s32.totalorder %s24, 0
      %p93 = por %p91, %p92
      %s94 = ssub.s32 %s18, %s25
      %p95 = scmp.eq.s32.totalorder %s94, 0
      %s97 = sadd.s32 %s96, 1
      %s98 = scalar_select %p95, %s96, %s97
      %p101 = pneg %p95
      %p102 = scmp.eq.s32.totalorder %s18, 1
      %p103 = por %p101, %p102
      %p104 = scmp.ne.s32.totalorder %s96, %s99
      %p105 = scmp.eq.s32.totalorder %s18, 0
      %p106 = por %p104, %p105
      %p107 = scmp.ne.s32.totalorder %s96, %s99
      %p108 = scmp.eq.s32.totalorder %s23, 1
      %p109 = por %p107, %p108
      %p110 = scmp.ne.s32.totalorder %s99, %s100
      %p111 = scmp.eq.s32.totalorder %s23, 0
      %p112 = por %p110, %p111
      %p113 = scmp.ne.s32.totalorder %s99, %s100
      %p114 = scmp.eq.s32.totalorder %s24, 1
      %p115 = por %p113, %p114
      %p117 = scmp.ne.s32.totalorder %s100, %s116
      %p118 = scmp.eq.s32.totalorder %s24, 0
      %p119 = por %p117, %p118
      %s120 = ssub.s32 %s18, %s25
      %p121 = scmp.eq.s32.totalorder %s120, 0
      %s123 = sadd.s32 %s122, 1
      %s124 = scalar_select %p121, %s122, %s123
      %p127 = pneg %p121
      %p128 = scmp.eq.s32.totalorder %s18, 1
      %p129 = por %p127, %p128
      %p130 = scmp.ne.s32.totalorder %s122, %s125
      %p131 = scmp.eq.s32.totalorder %s18, 0
      %p132 = por %p130, %p131
      %p133 = scmp.ne.s32.totalorder %s122, %s125
      %p134 = scmp.eq.s32.totalorder %s23, 1
      %p135 = por %p133, %p134
      %p136 = scmp.ne.s32.totalorder %s125, %s126
      %p137 = scmp.eq.s32.totalorder %s23, 0
      %p138 = por %p136, %p137
      %p139 = scmp.ne.s32.totalorder %s125, %s126
      %p140 = scmp.eq.s32.totalorder %s24, 1
      %p141 = por %p139, %p140
      %p143 = scmp.ne.s32.totalorder %s126, %s142
      %p144 = scmp.eq.s32.totalorder %s24, 0
      %p145 = por %p143, %p144
      %s146 = ssub.s32 %s18, %s25
      %p147 = scmp.eq.s32.totalorder %s146, 0
      %s149 = sadd.s32 %s148, 1
      %s150 = scalar_select %p147, %s148, %s149
      %p153 = pneg %p147
      %p154 = scmp.eq.s32.totalorder %s18, 1
      %p155 = por %p153, %p154
      %p156 = scmp.ne.s32.totalorder %s148, %s151
      %p157 = scmp.eq.s32.totalorder %s18, 0
      %p158 = por %p156, %p157
      %p159 = scmp.ne.s32.totalorder %s148, %s151
      %p160 = scmp.eq.s32.totalorder %s23, 1
      %p161 = por %p159, %p160
      %p162 = scmp.ne.s32.totalorder %s151, %s152
      %p163 = scmp.eq.s32.totalorder %s23, 0
      %p164 = por %p162, %p163
      %p165 = scmp.ne.s32.totalorder %s151, %s152
      %p166 = scmp.eq.s32.totalorder %s24, 1
      %p167 = por %p165, %p166
      %p169 = scmp.ne.s32.totalorder %s152, %s168
      %p170 = scmp.eq.s32.totalorder %s24, 0
      %p171 = por %p169, %p170
      %p172 = scmp.le.s32.totalorder 1, %s18
      %p173 = scmp.lt.s32.totalorder %s18, 3
      %p174 = pnand %p172, %p173
      %p175 = pneg %p174
      // Predicated region
      $region9: #{tpu_custom_call.1} parent=5 // pred_check
        _
      $region10: #{tpu_custom_call.1} parent=5 // pred_check_branch
        %177 = sbr.rel (%p174) target = $region12
      $region11: #{tpu_custom_call.1} parent=5 // pred_region
        %s178 = ssub.s32 %s18, 1
        // Predicated region
        $region13: #{tpu_custom_call.1} parent=11 // pred_check
          %p179 = pneg %p65
        $region14: #{tpu_custom_call.1} parent=11 // pred_check_branch
          %181 = sbr.rel (%p179) target = $region16
        $region15: #{tpu_custom_call.1} parent=11 // pred_region
          _
        $region16: #{tpu_custom_call.1} parent=11 // pred_fallthru
          _
        // Predicated region
        $region17: #{tpu_custom_call.1} parent=11 // pred_check
          %p182 = pneg %p86
        $region18: #{tpu_custom_call.1} parent=11 // pred_check_branch
          %184 = sbr.rel (%p182) target = $region20
        $region19: #{tpu_custom_call.1} parent=11 // pred_region
          _
        $region20: #{tpu_custom_call.1} parent=11 // pred_fallthru
          _
      $region12: #{tpu_custom_call.1} parent=5 // pred_fallthru
        _
      %p185 = scmp.lt.s32.totalorder %s18, 2
      // Predicated region
      $region21: #{tpu_custom_call.1} parent=5 // pred_check
        %p186 = pneg %p185
      $region22: #{tpu_custom_call.1} parent=5 // pred_check_branch
        %188 = sbr.rel (%p186) target = $region24
      $region23: #{tpu_custom_call.1} parent=5 // pred_region
        // Predicated region
        $region25: #{tpu_custom_call.1} parent=23 // pred_check
          %p189 = pneg %p38
        $region26: #{tpu_custom_call.1} parent=23 // pred_check_branch
          %191 = sbr.rel (%p189) target = $region28
        $region27: #{tpu_custom_call.1} parent=23 // pred_region
          %p192 = scmp.lt.s32.totalorder %s18, 1
          %s193 = scalar_select %p192, %s18, 1
          %s194 = smul.addr %s193, 48
          %s195 = smul.addr %s194, 4
          %s196 = scalar_lea.vmem %s0, %s195
        $region28: #{tpu_custom_call.1} parent=23 // pred_fallthru
          _
        // Predicated region
        $region29: #{tpu_custom_call.1} parent=23 // pred_check
          %p197 = pneg %p106
        $region30: #{tpu_custom_call.1} parent=23 // pred_check_branch
          %199 = sbr.rel (%p197) target = $region32
        $region31: #{tpu_custom_call.1} parent=23 // pred_region
          %p200 = scmp.lt.s32.totalorder %s18, 1
          %s201 = scalar_select %p200, %s18, 1
          %s202 = smul.addr %s201, 4
          %s203 = smul.addr %s202, 8
          %s204 = scalar_lea.vmem %s3, %s203
        $region32: #{tpu_custom_call.1} parent=23 // pred_fallthru
          _
      $region24: #{tpu_custom_call.1} parent=5 // pred_fallthru
        _
      %p205 = scmp.le.s32.totalorder 1, %s18
      %p206 = scmp.lt.s32.totalorder %s18, 3
      %p207 = pnand %p205, %p206
      %p208 = pneg %p207
      // Predicated region
      $region33: #{tpu_custom_call.1} parent=5 // pred_check
        _
      $region34: #{tpu_custom_call.1} parent=5 // pred_check_branch
        %210 = sbr.rel (%p207) target = $region36
      $region35: #{tpu_custom_call.1} parent=5 // pred_region
        %s211 = ssub.s32 %s18, 1
        %p212 = scmp.lt.s32.totalorder %s23, 1
        %s213 = scalar_select %p212, %s23, 1
        %s214 = smul.addr %s213, 48
        %s215 = smul.addr %s214, 4
        %s216 = scalar_lea.vmem %s0, %s215
        %p217 = pneg %p44
        %p218 = pneg %p41
        %p219 = pneg %p65
        %p220 = pneg %p62
        %p221 = pneg %p86
        %p222 = pneg %p83
        %p223 = scmp.lt.s32.totalorder %s23, 1
        %s224 = scalar_select %p223, %s23, 1
        %s225 = smul.addr %s224, 4
        %s226 = smul.addr %s225, 8
        %s227 = scalar_lea.vmem %s3, %s226
        %p228 = pneg %p112
        %p229 = pneg %p109
        %p230 = pneg %p138
        %p231 = pneg %p135
        %s232 = sand.u32 %s125, 1
        %s233 = scalar_lea.sflag [#allocation3], %s232
        %s234 = sand.u32 %s125, 1
        %s235 = smul.addr %s234, 72
        %s236 = scalar_lea.vmem [#allocation2], %s235
        %p237 = pneg %p164
        %p238 = pneg %p161
        %s239 = sand.u32 %s151, 1
        %s240 = scalar_lea.sflag [#allocation5], %s239
        %s241 = sand.u32 %s151, 1
        %s242 = smul.addr %s241, 8
        %s243 = scalar_lea.vmem [#allocation4], %s242
        %p244 = scmp.lt.s32.totalorder %s23, 1
        %s245 = scalar_select %p244, %s23, 1
        %s246 = smul.addr %s245, 48
        %s247 = smul.addr %s246, 4
        %s248 = scalar_lea.vmem %s0, %s247
        %p249 = scmp.lt.s32.totalorder %s23, 1
        %s250 = scalar_select %p249, %s23, 1
        %s251 = smul.addr %s250, 4
        %s252 = smul.addr %s251, 8
        %s253 = scalar_lea.vmem %s3, %s252
        %v255 = vld [vmem:[%s2] sm:$0x1]
        %v257 = vlaneseq
        %v258 = vshrl.u32 %v257, 7
        %v259 = vsub.s32 0, %v258
        %v260 = vrot.slane %v255, %v259
        %v262 = vld [vmem:[%s248] sm:$0xf]
        %v263 = vld [vmem:[%s248 + $0x4] sm:$0xf]
        %v264 = vld [vmem:[%s248 + $0x8] sm:$0xf]
        %v265 = vld [vmem:[%s248 + $0xc] sm:$0xf]
        %v266 = vld [vmem:[%s248 + $0x10] sm:$0xf]
        %v267 = vld [vmem:[%s248 + $0x14] sm:$0xf]
        %v268 = vld [vmem:[%s248 + $0x18] sm:$0xf]
        %v269 = vld [vmem:[%s248 + $0x1c] sm:$0xf]
        %v270 = vld [vmem:[%s248 + $0x20] sm:$0xf]
        %v271 = vld [vmem:[%s1] sm:$0x3]
        %v281 = vunpack.c.l.b16 %v262
        %v282 = vunpack.c.l.b16 %v263
        %v283 = vunpack.c.l.b16 %v264
        %v284 = vunpack.c.l.b16 %v265
        %v285 = vunpack.c.l.b16 %v266
        %v286 = vunpack.c.l.b16 %v267
        %v287 = vunpack.c.l.b16 %v268
        %v288 = vunpack.c.l.b16 %v269
        %v289 = vunpack.c.l.b16 %v270
        %v290 = vpack.c.b16 %v282, %v281
        %v291 = vpack.c.b16 %v284, %v283
        %v292 = vpack.c.b16 %v286, %v285
        %v293 = vpack.c.b16 %v288, %v287
        %v294 = vpack.c.b16 %v289, %v289
        %vm295 = vcmask 31744
        %v297 = vsel %vm295, %v290, 0
        %v300 = vsel %vm295, %v291, 0
        %v303 = vsel %vm295, %v292, 0
        %v306 = vsel %vm295, %v293, 0
        %v309 = vsel %vm295, %v294, 0
        %vm311 = vcmask 1041408
        %v313 = vsel %vm311, %v271, 0
        %315 = vmatprep.subr.bf16.mxu0 0
        %316 = vmatpush1.bf16.msra.mxu0 %v313
        %317 = vmatprep.subr.bf16.mxu0 0
        %318 = vmatpush1.bf16.msra.mxu0 0
        %319 = vmatprep.subr.bf16.mxu0 0
        %320 = vmatpush1.bf16.msra.mxu0 0
        %321 = vmatprep.subr.bf16.mxu0 0
        %322 = vmatpush1.bf16.msra.mxu0 0
        %323 = vmatprep.subr.bf16.mxu0 0
        %324 = vmatpush1.bf16.msra.mxu0 0
        %325 = vmatprep.subr.bf16.mxu0 0
        %326 = vmatpush1.bf16.msra.mxu0 0
        %327 = vmatprep.subr.bf16.mxu0 0
        %328 = vmatpush1.bf16.msra.mxu0 0
        %329 = vmatprep.subr.bf16.mxu0 0
        %330 = vmatpush1.bf16.msra.mxu0 0
        %331 = vmatprep.subr.bf16.mxu0 0
        %332 = vmatpush1.bf16.msra.mxu0 0
        %333 = vmatprep.subr.bf16.mxu0 0
        %334 = vmatpush1.bf16.msra.mxu0 0
        %335 = vmatprep.subr.bf16.mxu0 0
        %336 = vmatpush1.bf16.msra.mxu0 0
        %337 = vmatprep.subr.bf16.mxu0 0
        %338 = vmatpush1.bf16.msra.mxu0 0
        %339 = vmatprep.subr.bf16.mxu0 0
        %340 = vmatpush1.bf16.msra.mxu0 0
        %341 = vmatprep.subr.bf16.mxu0 0
        %342 = vmatpush1.bf16.msra.mxu0 0
        %343 = vmatprep.subr.bf16.mxu0 0
        %344 = vmatpush1.bf16.msra.mxu0 0
        %345 = vmatprep.subr.bf16.mxu0 0
        %346 = vmatpush1.bf16.msra.mxu0 0
        %347 = vmatprep.mubr.bf16.mxu0 0
        %348 = vmatmul.mubr.bf16.gmra.mrb[0].mxu0 %v297
        %v349 = vpop.f32.mrb[0].mxu0
        %v350 = vadd.f32 0.0, %v349
        %v351 = vpop.f32.mrb[0].mxu0
        %v352 = vpop.f32.mrb[0].mxu0
        %v353 = vadd.f32 0.0, %v352
        %v354 = vpop.f32.mrb[0].mxu0
        %355 = vmatprep.mubr.bf16.mxu0 0
        %356 = vmatmul.mubr.bf16.gmra.mrb[0].mxu0 %v300
        %v357 = vpop.f32.mrb[0].mxu0
        %v358 = vadd.f32 0.0, %v357
        %v359 = vpop.f32.mrb[0].mxu0
        %v360 = vpop.f32.mrb[0].mxu0
        %v361 = vadd.f32 0.0, %v360
        %v362 = vpop.f32.mrb[0].mxu0
        %363 = vmatprep.mubr.bf16.mxu0 0
        %364 = vmatmul.mubr.bf16.gmra.mrb[0].mxu0 %v303
        %v365 = vpop.f32.mrb[0].mxu0
        %v366 = vadd.f32 0.0, %v365
        %v367 = vpop.f32.mrb[0].mxu0
        %v368 = vpop.f32.mrb[0].mxu0
        %v369 = vadd.f32 0.0, %v368
        %v370 = vpop.f32.mrb[0].mxu0
        %371 = vmatprep.mubr.bf16.mxu0 0
        %372 = vmatmul.mubr.bf16.gmra.mrb[0].mxu0 %v306
        %v373 = vpop.f32.mrb[0].mxu0
        %v374 = vadd.f32 0.0, %v373
        %v375 = vpop.f32.mrb[0].mxu0
        %v376 = vpop.f32.mrb[0].mxu0
        %v377 = vadd.f32 0.0, %v376
        %v378 = vpop.f32.mrb[0].mxu0
        %379 = vmatprep.mubr.bf16.mxu0 0
        %380 = vmatmul.mubr.bf16.gmra.mrb[0].mxu0 %v309
        %v381 = vpop.f32.mrb[0].mxu0
        %v382 = vadd.f32 0.0, %v381
        %v383 = vpop.f32.mrb[0].mxu0
        %v384 = vpop.f32.mrb[0].mxu0
        %v385 = vpop.f32.mrb[0].mxu0
        %386 = vdwg.mxu0
        %v387 = vadd.f32 %v260, %v350
        %v388 = vadd.f32 %v260, %v353
        %v389 = vadd.f32 %v260, %v358
        %v390 = vadd.f32 %v260, %v361
        %v391 = vadd.f32 %v260, %v366
        %v392 = vadd.f32 %v260, %v369
        %v393 = vadd.f32 %v260, %v374
        %v394 = vadd.f32 %v260, %v377
        %v395 = vadd.f32 %v260, %v382
        %s396 = scalar_lea.vmem %s248, 48
        %v397 = vld [vmem:[%s396] sm:$0xf]
        %v398 = vld [vmem:[%s396 + $0x4] sm:$0xf]
        %v399 = vld [vmem:[%s396 + $0x8] sm:$0xf]
        %v400 = vld [vmem:[%s396 + $0xc] sm:$0xf]
        %v401 = vld [vmem:[%s396 + $0x10] sm:$0xf]
        %v402 = vld [vmem:[%s396 + $0x14] sm:$0xf]
        %v403 = vld [vmem:[%s396 + $0x18] sm:$0xf]
        %v404 = vld [vmem:[%s396 + $0x1c] sm:$0xf]
        %v405 = vld [vmem:[%s396 + $0x20] sm:$0xf]
        %s406 = scalar_lea.vmem %s1, 2
        %v407 = vld [vmem:[%s406] sm:$0x3]
        %v417 = vunpack.c.l.b16 %v397
        %v418 = vunpack.c.l.b16 %v398
        %v419 = vunpack.c.l.b16 %v399
        %v420 = vunpack.c.l.b16 %v400
        %v421 = vunpack.c.l.b16 %v401
        %v422 = vunpack.c.l.b16 %v402
        %v423 = vunpack.c.l.b16 %v403
        %v424 = vunpack.c.l.b16 %v404
        %v425 = vunpack.c.l.b16 %v405
        %v426 = vpack.c.b16 %v418, %v417
        %v427 = vpack.c.b16 %v420, %v419
        %v428 = vpack.c.b16 %v422, %v421
        %v429 = vpack.c.b16 %v424, %v423
        %v430 = vpack.c.b16 %v425, %v425
        %v432 = vsel %vm295, %v426, 0
        %v435 = vsel %vm295, %v427, 0
        %v438 = vsel %vm295, %v428, 0
        %v441 = vsel %vm295, %v429, 0
        %v444 = vsel %vm295, %v430, 0
        %v447 = vsel %vm311, %v407, 0
        %449 = vmatprep.subr.bf16.mxu0 0
        %450 = vmatpush1.bf16.msra.mxu0 %v447
        %451 = vmatprep.subr.bf16.mxu0 0
        %452 = vmatpush1.bf16.msra.mxu0 0
        %453 = vmatprep.subr.bf16.mxu0 0
        %454 = vmatpush1.bf16.msra.mxu0 0
        %455 = vmatprep.subr.bf16.mxu0 0
        %456 = vmatpush1.bf16.msra.mxu0 0
        %457 = vmatprep.subr.bf16.mxu0 0
        %458 = vmatpush1.bf16.msra.mxu0 0
        %459 = vmatprep.subr.bf16.mxu0 0
        %460 = vmatpush1.bf16.msra.mxu0 0
        %461 = vmatprep.subr.bf16.mxu0 0
        %462 = vmatpush1.bf16.msra.mxu0 0
        %463 = vmatprep.subr.bf16.mxu0 0
        %464 = vmatpush1.bf16.msra.mxu0 0
        %465 = vmatprep.subr.bf16.mxu0 0
        %466 = vmatpush1.bf16.msra.mxu0 0
        %467 = vmatprep.subr.bf16.mxu0 0
        %468 = vmatpush1.bf16.msra.mxu0 0
        %469 = vmatprep.subr.bf16.mxu0 0
        %470 = vmatpush1.bf16.msra.mxu0 0
        %471 = vmatprep.subr.bf16.mxu0 0
        %472 = vmatpush1.bf16.msra.mxu0 0
        %473 = vmatprep.subr.bf16.mxu0 0
        %474 = vmatpush1.bf16.msra.mxu0 0
        %475 = vmatprep.subr.bf16.mxu0 0
        %476 = vmatpush1.bf16.msra.mxu0 0
        %477 = vmatprep.subr.bf16.mxu0 0
        %478 = vmatpush1.bf16.msra.mxu0 0
        %479 = vmatprep.subr.bf16.mxu0 0
        %480 = vmatpush1.bf16.msra.mxu0 0
        %481 = vmatprep.mubr.bf16.mxu0 0
        %482 = vmatmul.mubr.bf16.gmra.mrb[0].mxu0 %v432
        %v483 = vpop.f32.mrb[0].mxu0
        %v484 = vadd.f32 0.0, %v483
        %v485 = vpop.f32.mrb[0].mxu0
        %v486 = vpop.f32.mrb[0].mxu0
        %v487 = vadd.f32 0.0, %v486
        %v488 = vpop.f32.mrb[0].mxu0
        %489 = vmatprep.mubr.bf16.mxu0 0
        %490 = vmatmul.mubr.bf16.gmra.mrb[0].mxu0 %v435
        %v491 = vpop.f32.mrb[0].mxu0
        %v492 = vadd.f32 0.0, %v491
        %v493 = vpop.f32.mrb[0].mxu0
        %v494 = vpop.f32.mrb[0].mxu0
        %v495 = vadd.f32 0.0, %v494
        %v496 = vpop.f32.mrb[0].mxu0
        %497 = vmatprep.mubr.bf16.mxu0 0
        %498 = vmatmul.mubr.bf16.gmra.mrb[0].mxu0 %v438
        %v499 = vpop.f32.mrb[0].mxu0
        %v500 = vadd.f32 0.0, %v499
        %v501 = vpop.f32.mrb[0].mxu0
        %v502 = vpop.f32.mrb[0].mxu0
        %v503 = vadd.f32 0.0, %v502
        %v504 = vpop.f32.mrb[0].mxu0
        %505 = vmatprep.mubr.bf16.mxu0 0
        %506 = vmatmul.mubr.bf16.gmra.mrb[0].mxu0 %v441
        %v507 = vpop.f32.mrb[0].mxu0
        %v508 = vadd.f32 0.0, %v507
        %v509 = vpop.f32.mrb[0].mxu0
        %v510 = vpop.f32.mrb[0].mxu0
        %v511 = vadd.f32 0.0, %v510
        %v512 = vpop.f32.mrb[0].mxu0
        %513 = vmatprep.mubr.bf16.mxu0 0
        %514 = vmatmul.mubr.bf16.gmra.mrb[0].mxu0 %v444
        %v515 = vpop.f32.mrb[0].mxu0
        %v516 = vadd.f32 0.0, %v515
        %v517 = vpop.f32.mrb[0].mxu0
        %v518 = vpop.f32.mrb[0].mxu0
        %v519 = vpop.f32.mrb[0].mxu0
        %520 = vdwg.mxu0
        %v521 = vadd.f32 %v387, %v484
        %v522 = vadd.f32 %v388, %v487
        %v523 = vadd.f32 %v389, %v492
        %v524 = vadd.f32 %v390, %v495
        %v525 = vadd.f32 %v391, %v500
        %v526 = vadd.f32 %v392, %v503
        %v527 = vadd.f32 %v393, %v508
        %v528 = vadd.f32 %v394, %v511
        %v529 = vadd.f32 %v395, %v516
        %v530 = vld [vmem:[%s248] sm:$0xf]
        %v531 = vld [vmem:[%s248 + $0x4] sm:$0xf]
        %v532 = vld [vmem:[%s248 + $0x8] sm:$0xf]
        %v533 = vld [vmem:[%s248 + $0xc] sm:$0xf]
        %v534 = vld [vmem:[%s248 + $0x10] sm:$0xf]
        %v535 = vld [vmem:[%s248 + $0x14] sm:$0xf]
        %v536 = vld [vmem:[%s248 + $0x18] sm:$0xf]
        %v537 = vld [vmem:[%s248 + $0x1c] sm:$0xf]
        %v538 = vld [vmem:[%s248 + $0x20] sm:$0xf]
        %v539 = vld [vmem:[%s248 + $0x24] sm:$0x1]
        %s540 = scalar_lea.vmem %s1, 4
        %v541 = vld [vmem:[%s540] sm:$0x3]
        %v552 = vunpack.c.l.b16 %v530
        %v553 = vunpack.c.l.b16 %v531
        %v554 = vunpack.c.l.b16 %v532
        %v555 = vunpack.c.l.b16 %v533
        %v556 = vunpack.c.l.b16 %v534
        %v557 = vunpack.c.l.b16 %v535
        %v558 = vunpack.c.l.b16 %v536
        %v559 = vunpack.c.l.b16 %v537
        %v560 = vunpack.c.l.b16 %v538
        %v561 = vunpack.c.l.b16 %v539
        %v562 = vpack.c.b16 %v553, %v552
        %v563 = vpack.c.b16 %v555, %v554
        %v564 = vpack.c.b16 %v557, %v556
        %v565 = vpack.c.b16 %v559, %v558
        %v566 = vpack.c.b16 %v561, %v560
        %vm567 = vsmask.f32 7424
        %v569 = vshrl.u32 %v562, 16
        %v571 = vshll.u32 %v562, 16
        %v573 = vrot.slane %v571, 1
        %v574 = vor.u32 %v569, %v573
        %v576 = vshll.u32 %v563, 16
        %v578 = vrot.slane %v576, 1
        %v579 = vsel %vm567, %v574, %v578
        %v580 = vshrl.u32 %v563, 16
        %v582 = vor.u32 %v580, %v578
        %v584 = vshll.u32 %v564, 16
        %v586 = vrot.slane %v584, 1
        %v587 = vsel %vm567, %v582, %v586
        %v588 = vshrl.u32 %v564, 16
        %v590 = vor.u32 %v588, %v586
        %v592 = vshll.u32 %v565, 16
        %v594 = vrot.slane %v592, 1
        %v595 = vsel %vm567, %v590, %v594
        %v596 = vshrl.u32 %v565, 16
        %v598 = vor.u32 %v596, %v594
        %v600 = vshll.u32 %v566, 16
        %v602 = vrot.slane %v600, 1
        %v603 = vsel %vm567, %v598, %v602
        %v604 = vshrl.u32 %v566, 16
        %v606 = vor.u32 %v604, %v602
        %v608 = vsel %vm295, %v579, 0
        %v611 = vsel %vm295, %v587, 0
        %v614 = vsel %vm295, %v595, 0
        %v617 = vsel %vm295, %v603, 0
        %v620 = vsel %vm295, %v606, 0
        %v623 = vsel %vm311, %v541, 0
        %625 = vmatprep.subr.bf16.mxu0 0
        %626 = vmatpush1.bf16.msra.mxu0 %v623
        %627 = vmatprep.subr.bf16.mxu0 0
        %628 = vmatpush1.bf16.msra.mxu0 0
        %629 = vmatprep.subr.bf16.mxu0 0
        %630 = vmatpush1.bf16.msra.mxu0 0
        %631 = vmatprep.subr.bf16.mxu0 0
        %632 = vmatpush1.bf16.msra.mxu0 0
        %633 = vmatprep.subr.bf16.mxu0 0
        %634 = vmatpush1.bf16.msra.mxu0 0
        %635 = vmatprep.subr.bf16.mxu0 0
        %636 = vmatpush1.bf16.msra.mxu0 0
        %637 = vmatprep.subr.bf16.mxu0 0
        %638 = vmatpush1.bf16.msra.mxu0 0
        %639 = vmatprep.subr.bf16.mxu0 0
        %640 = vmatpush1.bf16.msra.mxu0 0
        %641 = vmatprep.subr.bf16.mxu0 0
        %642 = vmatpush1.bf16.msra.mxu0 0
        %643 = vmatprep.subr.bf16.mxu0 0
        %644 = vmatpush1.bf16.msra.mxu0 0
        %645 = vmatprep.subr.bf16.mxu0 0
        %646 = vmatpush1.bf16.msra.mxu0 0
        %647 = vmatprep.subr.bf16.mxu0 0
        %648 = vmatpush1.bf16.msra.mxu0 0
        %649 = vmatprep.subr.bf16.mxu0 0
        %650 = vmatpush1.bf16.msra.mxu0 0
        %651 = vmatprep.subr.bf16.mxu0 0
        %652 = vmatpush1.bf16.msra.mxu0 0
        %653 = vmatprep.subr.bf16.mxu0 0
        %654 = vmatpush1.bf16.msra.mxu0 0
        %655 = vmatprep.subr.bf16.mxu0 0
        %656 = vmatpush1.bf16.msra.mxu0 0
        %657 = vmatprep.mubr.bf16.mxu0 0
        %658 = vmatmul.mubr.bf16.gmra.mrb[0].mxu0 %v608
        %v659 = vpop.f32.mrb[0].mxu0
        %v660 = vadd.f32 0.0, %v659
        %v661 = vpop.f32.mrb[0].mxu0
        %v662 = vpop.f32.mrb[0].mxu0
        %v663 = vadd.f32 0.0, %v662
        %v664 = vpop.f32.mrb[0].mxu0
        %665 = vmatprep.mubr.bf16.mxu0 0
        %666 = vmatmul.mubr.bf16.gmra.mrb[0].mxu0 %v611
        %v667 = vpop.f32.mrb[0].mxu0
        %v668 = vadd.f32 0.0, %v667
        %v669 = vpop.f32.mrb[0].mxu0
        %v670 = vpop.f32.mrb[0].mxu0
        %v671 = vadd.f32 0.0, %v670
        %v672 = vpop.f32.mrb[0].mxu0
        %673 = vmatprep.mubr.bf16.mxu0 0
        %674 = vmatmul.mubr.bf16.gmra.mrb[0].mxu0 %v614
        %v675 = vpop.f32.mrb[0].mxu0
        %v676 = vadd.f32 0.0, %v675
        %v677 = vpop.f32.mrb[0].mxu0
        %v678 = vpop.f32.mrb[0].mxu0
        %v679 = vadd.f32 0.0, %v678
        %v680 = vpop.f32.mrb[0].mxu0
        %681 = vmatprep.mubr.bf16.mxu0 0
        %682 = vmatmul.mubr.bf16.gmra.mrb[0].mxu0 %v617
        %v683 = vpop.f32.mrb[0].mxu0
        %v684 = vadd.f32 0.0, %v683
        %v685 = vpop.f32.mrb[0].mxu0
        %v686 = vpop.f32.mrb[0].mxu0
        %v687 = vadd.f32 0.0, %v686
        %v688 = vpop.f32.mrb[0].mxu0
        %689 = vmatprep.mubr.bf16.mxu0 0
        %690 = vmatmul.mubr.bf16.gmra.mrb[0].mxu0 %v620
        %v691 = vpop.f32.mrb[0].mxu0
        %v692 = vadd.f32 0.0, %v691
        %v693 = vpop.f32.mrb[0].mxu0
        %v694 = vpop.f32.mrb[0].mxu0
        %v695 = vpop.f32.mrb[0].mxu0
        %696 = vdwg.mxu0
        %v697 = vadd.f32 %v521, %v660
        %v698 = vadd.f32 %v522, %v663
        %v699 = vadd.f32 %v523, %v668
        %v700 = vadd.f32 %v524, %v671
        %v701 = vadd.f32 %v525, %v676
        %v702 = vadd.f32 %v526, %v679
        %v703 = vadd.f32 %v527, %v684
        %v704 = vadd.f32 %v528, %v687
        %v705 = vadd.f32 %v529, %v692
        %s706 = scalar_lea.vmem %s248, 96
        %v707 = vld [vmem:[%s706] sm:$0xf]
        %v708 = vld [vmem:[%s706 + $0x4] sm:$0xf]
        %v709 = vld [vmem:[%s706 + $0x8] sm:$0xf]
        %v710 = vld [vmem:[%s706 + $0xc] sm:$0xf]
        %v711 = vld [vmem:[%s706 + $0x10] sm:$0xf]
        %v712 = vld [vmem:[%s706 + $0x14] sm:$0xf]
        %v713 = vld [vmem:[%s706 + $0x18] sm:$0xf]
        %v714 = vld [vmem:[%s706 + $0x1c] sm:$0xf]
        %v715 = vld [vmem:[%s706 + $0x20] sm:$0xf]
        %s716 = scalar_lea.vmem %s1, 6
        %v717 = vld [vmem:[%s716] sm:$0x3]
        %v727 = vunpack.c.l.b16 %v707
        %v728 = vunpack.c.l.b16 %v708
        %v729 = vunpack.c.l.b16 %v709
        %v730 = vunpack.c.l.b16 %v710
        %v731 = vunpack.c.l.b16 %v711
        %v732 = vunpack.c.l.b16 %v712
        %v733 = vunpack.c.l.b16 %v713
        %v734 = vunpack.c.l.b16 %v714
        %v735 = vunpack.c.l.b16 %v715
        %v736 = vpack.c.b16 %v728, %v727
        %v737 = vpack.c.b16 %v730, %v729
        %v738 = vpack.c.b16 %v732, %v731
        %v739 = vpack.c.b16 %v734, %v733
        %v740 = vpack.c.b16 %v735, %v735
        %v742 = vsel %vm295, %v736, 0
        %v745 = vsel %vm295, %v737, 0
        %v748 = vsel %vm295, %v738, 0
        %v751 = vsel %vm295, %v739, 0
        %v754 = vsel %vm295, %v740, 0
        %v757 = vsel %vm311, %v717, 0
        %759 = vmatprep.subr.bf16.mxu0 0
        %760 = vmatpush1.bf16.msra.mxu0 %v757
        %761 = vmatprep.subr.bf16.mxu0 0
        %762 = vmatpush1.bf16.msra.mxu0 0
        %763 = vmatprep.subr.bf16.mxu0 0
        %764 = vmatpush1.bf16.msra.mxu0 0
        %765 = vmatprep.subr.bf16.mxu0 0
        %766 = vmatpush1.bf16.msra.mxu0 0
        %767 = vmatprep.subr.bf16.mxu0 0
        %768 = vmatpush1.bf16.msra.mxu0 0
        %769 = vmatprep.subr.bf16.mxu0 0
        %770 = vmatpush1.bf16.msra.mxu0 0
        %771 = vmatprep.subr.bf16.mxu0 0
        %772 = vmatpush1.bf16.msra.mxu0 0
        %773 = vmatprep.subr.bf16.mxu0 0
        %774 = vmatpush1.bf16.msra.mxu0 0
        %775 = vmatprep.subr.bf16.mxu0 0
        %776 = vmatpush1.bf16.msra.mxu0 0
        %777 = vmatprep.subr.bf16.mxu0 0
        %778 = vmatpush1.bf16.msra.mxu0 0
        %779 = vmatprep.subr.bf16.mxu0 0
        %780 = vmatpush1.bf16.msra.mxu0 0
        %781 = vmatprep.subr.bf16.mxu0 0
        %782 = vmatpush1.bf16.msra.mxu0 0
        %783 = vmatprep.subr.bf16.mxu0 0
        %784 = vmatpush1.bf16.msra.mxu0 0
        %785 = vmatprep.subr.bf16.mxu0 0
        %786 = vmatpush1.bf16.msra.mxu0 0
        %787 = vmatprep.subr.bf16.mxu0 0
        %788 = vmatpush1.bf16.msra.mxu0 0
        %789 = vmatprep.subr.bf16.mxu0 0
        %790 = vmatpush1.bf16.msra.mxu0 0
        %791 = vmatprep.mubr.bf16.mxu0 0
        %792 = vmatmul.mubr.bf16.gmra.mrb[0].mxu0 %v742
        %v793 = vpop.f32.mrb[0].mxu0
        %v794 = vadd.f32 0.0, %v793
        %v795 = vpop.f32.mrb[0].mxu0
        %v796 = vpop.f32.mrb[0].mxu0
        %v797 = vadd.f32 0.0, %v796
        %v798 = vpop.f32.mrb[0].mxu0
        %799 = vmatprep.mubr.bf16.mxu0 0
        %800 = vmatmul.mubr.bf16.gmra.mrb[0].mxu0 %v745
        %v801 = vpop.f32.mrb[0].mxu0
        %v802 = vadd.f32 0.0, %v801
        %v803 = vpop.f32.mrb[0].mxu0
        %v804 = vpop.f32.mrb[0].mxu0
        %v805 = vadd.f32 0.0, %v804
        %v806 = vpop.f32.mrb[0].mxu0
        %807 = vmatprep.mubr.bf16.mxu0 0
        %808 = vmatmul.mubr.bf16.gmra.mrb[0].mxu0 %v748
        %v809 = vpop.f32.mrb[0].mxu0
        %v810 = vadd.f32 0.0, %v809
        %v811 = vpop.f32.mrb[0].mxu0
        %v812 = vpop.f32.mrb[0].mxu0
        %v813 = vadd.f32 0.0, %v812
        %v814 = vpop.f32.mrb[0].mxu0
        %815 = vmatprep.mubr.bf16.mxu0 0
        %816 = vmatmul.mubr.bf16.gmra.mrb[0].mxu0 %v751
        %v817 = vpop.f32.mrb[0].mxu0
        %v818 = vadd.f32 0.0, %v817
        %v819 = vpop.f32.mrb[0].mxu0
        %v820 = vpop.f32.mrb[0].mxu0
        %v821 = vadd.f32 0.0, %v820
        %v822 = vpop.f32.mrb[0].mxu0
        %823 = vmatprep.mubr.bf16.mxu0 0
        %824 = vmatmul.mubr.bf16.gmra.mrb[0].mxu0 %v754
        %v825 = vpop.f32.mrb[0].mxu0
        %v826 = vadd.f32 0.0, %v825
        %v827 = vpop.f32.mrb[0].mxu0
        %v828 = vpop.f32.mrb[0].mxu0
        %v829 = vpop.f32.mrb[0].mxu0
        %830 = vdwg.mxu0
        %v831 = vadd.f32 %v697, %v794
        %v832 = vadd.f32 %v698, %v797
        %v833 = vadd.f32 %v699, %v802
        %v834 = vadd.f32 %v700, %v805
        %v835 = vadd.f32 %v701, %v810
        %v836 = vadd.f32 %v702, %v813
        %v837 = vadd.f32 %v703, %v818
        %v838 = vadd.f32 %v704, %v821
        %v839 = vadd.f32 %v705, %v826
        %s840 = scalar_lea.vmem %s248, 144
        %v841 = vld [vmem:[%s840] sm:$0xf]
        %v842 = vld [vmem:[%s840 + $0x4] sm:$0xf]
        %v843 = vld [vmem:[%s840 + $0x8] sm:$0xf]
        %v844 = vld [vmem:[%s840 + $0xc] sm:$0xf]
        %v845 = vld [vmem:[%s840 + $0x10] sm:$0xf]
        %v846 = vld [vmem:[%s840 + $0x14] sm:$0xf]
        %v847 = vld [vmem:[%s840 + $0x18] sm:$0xf]
        %v848 = vld [vmem:[%s840 + $0x1c] sm:$0xf]
        %v849 = vld [vmem:[%s840 + $0x20] sm:$0xf]
        %s850 = scalar_lea.vmem %s1, 8
        %v851 = vld [vmem:[%s850] sm:$0x3]
        %v861 = vunpack.c.l.b16 %v841
        %v862 = vunpack.c.l.b16 %v842
        %v863 = vunpack.c.l.b16 %v843
        %v864 = vunpack.c.l.b16 %v844
        %v865 = vunpack.c.l.b16 %v845
        %v866 = vunpack.c.l.b16 %v846
        %v867 = vunpack.c.l.b16 %v847
        %v868 = vunpack.c.l.b16 %v848
        %v869 = vunpack.c.l.b16 %v849
        %v870 = vpack.c.b16 %v862, %v861
        %v871 = vpack.c.b16 %v864, %v863
        %v872 = vpack.c.b16 %v866, %v865
        %v873 = vpack.c.b16 %v868, %v867
        %v874 = vpack.c.b16 %v869, %v869
        %v876 = vsel %vm295, %v870, 0
        %v879 = vsel %vm295, %v871, 0
        %v882 = vsel %vm295, %v872, 0
        %v885 = vsel %vm295, %v873, 0
        %v888 = vsel %vm295, %v874, 0
        %v891 = vsel %vm311, %v851, 0
        %893 = vmatprep.subr.bf16.mxu0 0
        %894 = vmatpush1.bf16.msra.mxu0 %v891
        %895 = vmatprep.subr.bf16.mxu0 0
        %896 = vmatpush1.bf16.msra.mxu0 0
        %897 = vmatprep.subr.bf16.mxu0 0
        %898 = vmatpush1.bf16.msra.mxu0 0
        %899 = vmatprep.subr.bf16.mxu0 0
        %900 = vmatpush1.bf16.msra.mxu0 0
        %901 = vmatprep.subr.bf16.mxu0 0
        %902 = vmatpush1.bf16.msra.mxu0 0
        %903 = vmatprep.subr.bf16.mxu0 0
        %904 = vmatpush1.bf16.msra.mxu0 0
        %905 = vmatprep.subr.bf16.mxu0 0
        %906 = vmatpush1.bf16.msra.mxu0 0
        %907 = vmatprep.subr.bf16.mxu0 0
        %908 = vmatpush1.bf16.msra.mxu0 0
        %909 = vmatprep.subr.bf16.mxu0 0
        %910 = vmatpush1.bf16.msra.mxu0 0
        %911 = vmatprep.subr.bf16.mxu0 0
        %912 = vmatpush1.bf16.msra.mxu0 0
        %913 = vmatprep.subr.bf16.mxu0 0
        %914 = vmatpush1.bf16.msra.mxu0 0
        %915 = vmatprep.subr.bf16.mxu0 0
        %916 = vmatpush1.bf16.msra.mxu0 0
        %917 = vmatprep.subr.bf16.mxu0 0
        %918 = vmatpush1.bf16.msra.mxu0 0
        %919 = vmatprep.subr.bf16.mxu0 0
        %920 = vmatpush1.bf16.msra.mxu0 0
        %921 = vmatprep.subr.bf16.mxu0 0
        %922 = vmatpush1.bf16.msra.mxu0 0
        %923 = vmatprep.subr.bf16.mxu0 0
        %924 = vmatpush1.bf16.msra.mxu0 0
        %925 = vmatprep.mubr.bf16.mxu0 0
        %926 = vmatmul.mubr.bf16.gmra.mrb[0].mxu0 %v876
        %v927 = vpop.f32.mrb[0].mxu0
        %v928 = vadd.f32 0.0, %v927
        %v929 = vpop.f32.mrb[0].mxu0
        %v930 = vpop.f32.mrb[0].mxu0
        %v931 = vadd.f32 0.0, %v930
        %v932 = vpop.f32.mrb[0].mxu0
        %933 = vmatprep.mubr.bf16.mxu0 0
        %934 = vmatmul.mubr.bf16.gmra.mrb[0].mxu0 %v879
        %v935 = vpop.f32.mrb[0].mxu0
        %v936 = vadd.f32 0.0, %v935
        %v937 = vpop.f32.mrb[0].mxu0
        %v938 = vpop.f32.mrb[0].mxu0
        %v939 = vadd.f32 0.0, %v938
        %v940 = vpop.f32.mrb[0].mxu0
        %941 = vmatprep.mubr.bf16.mxu0 0
        %942 = vmatmul.mubr.bf16.gmra.mrb[0].mxu0 %v882
        %v943 = vpop.f32.mrb[0].mxu0
        %v944 = vadd.f32 0.0, %v943
        %v945 = vpop.f32.mrb[0].mxu0
        %v946 = vpop.f32.mrb[0].mxu0
        %v947 = vadd.f32 0.0, %v946
        %v948 = vpop.f32.mrb[0].mxu0
        %949 = vmatprep.mubr.bf16.mxu0 0
        %950 = vmatmul.mubr.bf16.gmra.mrb[0].mxu0 %v885
        %v951 = vpop.f32.mrb[0].mxu0
        %v952 = vadd.f32 0.0, %v951
        %v953 = vpop.f32.mrb[0].mxu0
        %v954 = vpop.f32.mrb[0].mxu0
        %v955 = vadd.f32 0.0, %v954
        %v956 = vpop.f32.mrb[0].mxu0
        %957 = vmatprep.mubr.bf16.mxu0 0
        %958 = vmatmul.mubr.bf16.gmra.mrb[0].mxu0 %v888
        %v959 = vpop.f32.mrb[0].mxu0
        %v960 = vadd.f32 0.0, %v959
        %v961 = vpop.f32.mrb[0].mxu0
        %v962 = vpop.f32.mrb[0].mxu0
        %v963 = vpop.f32.mrb[0].mxu0
        %964 = vdwg.mxu0
        %v965 = vadd.f32 %v831, %v928
        %v966 = vadd.f32 %v832, %v931
        %v967 = vadd.f32 %v833, %v936
        %v968 = vadd.f32 %v834, %v939
        %v969 = vadd.f32 %v835, %v944
        %v970 = vadd.f32 %v836, %v947
        %v971 = vadd.f32 %v837, %v952
        %v972 = vadd.f32 %v838, %v955
        %v973 = vadd.f32 %v839, %v960
        %v974 = vld [vmem:[%s706] sm:$0xf]
        %v975 = vld [vmem:[%s706 + $0x4] sm:$0xf]
        %v976 = vld [vmem:[%s706 + $0x8] sm:$0xf]
        %v977 = vld [vmem:[%s706 + $0xc] sm:$0xf]
        %v978 = vld [vmem:[%s706 + $0x10] sm:$0xf]
        %v979 = vld [vmem:[%s706 + $0x14] sm:$0xf]
        %v980 = vld [vmem:[%s706 + $0x18] sm:$0xf]
        %v981 = vld [vmem:[%s706 + $0x1c] sm:$0xf]
        %v982 = vld [vmem:[%s706 + $0x20] sm:$0xf]
        %v983 = vld [vmem:[%s706 + $0x24] sm:$0x1]
        %s984 = scalar_lea.vmem %s1, 10
        %v985 = vld [vmem:[%s984] sm:$0x3]
        %v996 = vunpack.c.l.b16 %v974
        %v997 = vunpack.c.l.b16 %v975
        %v998 = vunpack.c.l.b16 %v976
        %v999 = vunpack.c.l.b16 %v977
        %v1000 = vunpack.c.l.b16 %v978
        %v1001 = vunpack.c.l.b16 %v979
        %v1002 = vunpack.c.l.b16 %v980
        %v1003 = vunpack.c.l.b16 %v981
        %v1004 = vunpack.c.l.b16 %v982
        %v1005 = vunpack.c.l.b16 %v983
        %v1006 = vpack.c.b16 %v997, %v996
        %v1007 = vpack.c.b16 %v999, %v998
        %v1008 = vpack.c.b16 %v1001, %v1000
        %v1009 = vpack.c.b16 %v1003, %v1002
        %v1010 = vpack.c.b16 %v1005, %v1004
        %v1012 = vshrl.u32 %v1006, 16
        %v1014 = vshll.u32 %v1006, 16
        %v1016 = vrot.slane %v1014, 1
        %v1017 = vor.u32 %v1012, %v1016
        %v1019 = vshll.u32 %v1007, 16
        %v1021 = vrot.slane %v1019, 1
        %v1022 = vsel %vm567, %v1017, %v1021
        %v1023 = vshrl.u32 %v1007, 16
        %v1025 = vor.u32 %v1023, %v1021
        %v1027 = vshll.u32 %v1008, 16
        %v1029 = vrot.slane %v1027, 1
        %v1030 = vsel %vm567, %v1025, %v1029
        %v1031 = vshrl.u32 %v1008, 16
        %v1033 = vor.u32 %v1031, %v1029
        %v1035 = vshll.u32 %v1009, 16
        %v1037 = vrot.slane %v1035, 1
        %v1038 = vsel %vm567, %v1033, %v1037
        %v1039 = vshrl.u32 %v1009, 16
        %v1041 = vor.u32 %v1039, %v1037
        %v1043 = vshll.u32 %v1010, 16
        %v1045 = vrot.slane %v1043, 1
        %v1046 = vsel %vm567, %v1041, %v1045
        %v1047 = vshrl.u32 %v1010, 16
        %v1049 = vor.u32 %v1047, %v1045
        %v1051 = vsel %vm295, %v1022, 0
        %v1054 = vsel %vm295, %v1030, 0
        %v1057 = vsel %vm295, %v1038, 0
        %v1060 = vsel %vm295, %v1046, 0
        %v1063 = vsel %vm295, %v1049, 0
        %v1066 = vsel %vm311, %v985, 0
        %1068 = vmatprep.subr.bf16.mxu0 0
        %1069 = vmatpush1.bf16.msra.mxu0 %v1066
        %1070 = vmatprep.subr.bf16.mxu0 0
        %1071 = vmatpush1.bf16.msra.mxu0 0
        %1072 = vmatprep.subr.bf16.mxu0 0
        %1073 = vmatpush1.bf16.msra.mxu0 0
        %1074 = vmatprep.subr.bf16.mxu0 0
        %1075 = vmatpush1.bf16.msra.mxu0 0
        %1076 = vmatprep.subr.bf16.mxu0 0
        %1077 = vmatpush1.bf16.msra.mxu0 0
        %1078 = vmatprep.subr.bf16.mxu0 0
        %1079 = vmatpush1.bf16.msra.mxu0 0
        %1080 = vmatprep.subr.bf16.mxu0 0
        %1081 = vmatpush1.bf16.msra.mxu0 0
        %1082 = vmatprep.subr.bf16.mxu0 0
        %1083 = vmatpush1.bf16.msra.mxu0 0
        %1084 = vmatprep.subr.bf16.mxu0 0
        %1085 = vmatpush1.bf16.msra.mxu0 0
        %1086 = vmatprep.subr.bf16.mxu0 0
        %1087 = vmatpush1.bf16.msra.mxu0 0
        %1088 = vmatprep.subr.bf16.mxu0 0
        %1089 = vmatpush1.bf16.msra.mxu0 0
        %1090 = vmatprep.subr.bf16.mxu0 0
        %1091 = vmatpush1.bf16.msra.mxu0 0
        %1092 = vmatprep.subr.bf16.mxu0 0
        %1093 = vmatpush1.bf16.msra.mxu0 0
        %1094 = vmatprep.subr.bf16.mxu0 0
        %1095 = vmatpush1.bf16.msra.mxu0 0
        %1096 = vmatprep.subr.bf16.mxu0 0
        %1097 = vmatpush1.bf16.msra.mxu0 0
        %1098 = vmatprep.subr.bf16.mxu0 0
        %1099 = vmatpush1.bf16.msra.mxu0 0
        %1100 = vmatprep.mubr.bf16.mxu0 0
        %1101 = vmatmul.mubr.bf16.gmra.mrb[0].mxu0 %v1051
        %v1102 = vpop.f32.mrb[0].mxu0
        %v1103 = vadd.f32 0.0, %v1102
        %v1104 = vpop.f32.mrb[0].mxu0
        %v1105 = vpop.f32.mrb[0].mxu0
        %v1106 = vadd.f32 0.0, %v1105
        %v1107 = vpop.f32.mrb[0].mxu0
        %1108 = vmatprep.mubr.bf16.mxu0 0
        %1109 = vmatmul.mubr.bf16.gmra.mrb[0].mxu0 %v1054
        %v1110 = vpop.f32.mrb[0].mxu0
        %v1111 = vadd.f32 0.0, %v1110
        %v1112 = vpop.f32.mrb[0].mxu0
        %v1113 = vpop.f32.mrb[0].mxu0
        %v1114 = vadd.f32 0.0, %v1113
        %v1115 = vpop.f32.mrb[0].mxu0
        %1116 = vmatprep.mubr.bf16.mxu0 0
        %1117 = vmatmul.mubr.bf16.gmra.mrb[0].mxu0 %v1057
        %v1118 = vpop.f32.mrb[0].mxu0
        %v1119 = vadd.f32 0.0, %v1118
        %v1120 = vpop.f32.mrb[0].mxu0
        %v1121 = vpop.f32.mrb[0].mxu0
        %v1122 = vadd.f32 0.0, %v1121
        %v1123 = vpop.f32.mrb[0].mxu0
        %1124 = vmatprep.mubr.bf16.mxu0 0
        %1125 = vmatmul.mubr.bf16.gmra.mrb[0].mxu0 %v1060
        %v1126 = vpop.f32.mrb[0].mxu0
        %v1127 = vadd.f32 0.0, %v1126
        %v1128 = vpop.f32.mrb[0].mxu0
        %v1129 = vpop.f32.mrb[0].mxu0
        %v1130 = vadd.f32 0.0, %v1129
        %v1131 = vpop.f32.mrb[0].mxu0
        %1132 = vmatprep.mubr.bf16.mxu0 0
        %1133 = vmatmul.mubr.bf16.gmra.mrb[0].mxu0 %v1063
        %v1134 = vpop.f32.mrb[0].mxu0
        %v1135 = vadd.f32 0.0, %v1134
        %v1136 = vpop.f32.mrb[0].mxu0
        %v1137 = vpop.f32.mrb[0].mxu0
        %v1138 = vpop.f32.mrb[0].mxu0
        %1139 = vdwg.mxu0
        %v1140 = vadd.f32 %v965, %v1103
        %v1141 = vadd.f32 %v966, %v1106
        %v1142 = vadd.f32 %v967, %v1111
        %v1143 = vadd.f32 %v968, %v1114
        %v1144 = vadd.f32 %v969, %v1119
        %v1145 = vadd.f32 %v970, %v1122
        %v1146 = vadd.f32 %v971, %v1127
        %v1147 = vadd.f32 %v972, %v1130
        %v1148 = vadd.f32 %v973, %v1135
        %v1149 = vld [vmem:[%s248 + $0x4] sm:$0xf]
        %v1150 = vld [vmem:[%s248 + $0x8] sm:$0xf]
        %v1151 = vld [vmem:[%s248 + $0xc] sm:$0xf]
        %v1152 = vld [vmem:[%s248 + $0x10] sm:$0xf]
        %v1153 = vld [vmem:[%s248 + $0x14] sm:$0xf]
        %v1154 = vld [vmem:[%s248 + $0x18] sm:$0xf]
        %v1155 = vld [vmem:[%s248 + $0x1c] sm:$0xf]
        %v1156 = vld [vmem:[%s248 + $0x20] sm:$0xf]
        %v1157 = vld [vmem:[%s248 + $0x24] sm:$0xf]
        %v1158 = vld [vmem:[%s248 + $0x28] sm:$0x1]
        %s1159 = scalar_lea.vmem %s1, 12
        %v1160 = vld [vmem:[%s1159] sm:$0x3]
        %v1171 = vunpack.c.l.b16 %v1149
        %v1172 = vunpack.c.l.b16 %v1150
        %v1173 = vunpack.c.l.b16 %v1151
        %v1174 = vunpack.c.l.b16 %v1152
        %v1175 = vunpack.c.l.b16 %v1153
        %v1176 = vunpack.c.l.b16 %v1154
        %v1177 = vunpack.c.l.b16 %v1155
        %v1178 = vunpack.c.l.b16 %v1156
        %v1179 = vunpack.c.l.b16 %v1157
        %v1180 = vunpack.c.l.b16 %v1158
        %v1181 = vpack.c.b16 %v1172, %v1171
        %v1182 = vpack.c.b16 %v1174, %v1173
        %v1183 = vpack.c.b16 %v1176, %v1175
        %v1184 = vpack.c.b16 %v1178, %v1177
        %v1185 = vpack.c.b16 %v1180, %v1179
        %v1187 = vshrl.u32 %v1181, 16
        %v1189 = vshll.u32 %v1181, 16
        %v1191 = vrot.slane %v1189, 1
        %v1192 = vor.u32 %v1187, %v1191
        %v1194 = vshll.u32 %v1182, 16
        %v1196 = vrot.slane %v1194, 1
        %v1197 = vsel %vm567, %v1192, %v1196
        %v1198 = vshrl.u32 %v1182, 16
        %v1200 = vor.u32 %v1198, %v1196
        %v1202 = vshll.u32 %v1183, 16
        %v1204 = vrot.slane %v1202, 1
        %v1205 = vsel %vm567, %v1200, %v1204
        %v1206 = vshrl.u32 %v1183, 16
        %v1208 = vor.u32 %v1206, %v1204
        %v1210 = vshll.u32 %v1184, 16
        %v1212 = vrot.slane %v1210, 1
        %v1213 = vsel %vm567, %v1208, %v1212
        %v1214 = vshrl.u32 %v1184, 16
        %v1216 = vor.u32 %v1214, %v1212
        %v1218 = vshll.u32 %v1185, 16
        %v1220 = vrot.slane %v1218, 1
        %v1221 = vsel %vm567, %v1216, %v1220
        %v1222 = vshrl.u32 %v1185, 16
        %v1224 = vor.u32 %v1222, %v1220
        %v1226 = vsel %vm295, %v1197, 0
        %v1229 = vsel %vm295, %v1205, 0
        %v1232 = vsel %vm295, %v1213, 0
        %v1235 = vsel %vm295, %v1221, 0
        %v1238 = vsel %vm295, %v1224, 0
        %v1241 = vsel %vm311, %v1160, 0
        %1243 = vmatprep.subr.bf16.mxu0 0
        %1244 = vmatpush1.bf16.msra.mxu0 %v1241
        %1245 = vmatprep.subr.bf16.mxu0 0
        %1246 = vmatpush1.bf16.msra.mxu0 0
        %1247 = vmatprep.subr.bf16.mxu0 0
        %1248 = vmatpush1.bf16.msra.mxu0 0
        %1249 = vmatprep.subr.bf16.mxu0 0
        %1250 = vmatpush1.bf16.msra.mxu0 0
        %1251 = vmatprep.subr.bf16.mxu0 0
        %1252 = vmatpush1.bf16.msra.mxu0 0
        %1253 = vmatprep.subr.bf16.mxu0 0
        %1254 = vmatpush1.bf16.msra.mxu0 0
        %1255 = vmatprep.subr.bf16.mxu0 0
        %1256 = vmatpush1.bf16.msra.mxu0 0
        %1257 = vmatprep.subr.bf16.mxu0 0
        %1258 = vmatpush1.bf16.msra.mxu0 0
        %1259 = vmatprep.subr.bf16.mxu0 0
        %1260 = vmatpush1.bf16.msra.mxu0 0
        %1261 = vmatprep.subr.bf16.mxu0 0
        %1262 = vmatpush1.bf16.msra.mxu0 0
        %1263 = vmatprep.subr.bf16.mxu0 0
        %1264 = vmatpush1.bf16.msra.mxu0 0
        %1265 = vmatprep.subr.bf16.mxu0 0
        %1266 = vmatpush1.bf16.msra.mxu0 0
        %1267 = vmatprep.subr.bf16.mxu0 0
        %1268 = vmatpush1.bf16.msra.mxu0 0
        %1269 = vmatprep.subr.bf16.mxu0 0
        %1270 = vmatpush1.bf16.msra.mxu0 0
        %1271 = vmatprep.subr.bf16.mxu0 0
        %1272 = vmatpush1.bf16.msra.mxu0 0
        %1273 = vmatprep.subr.bf16.mxu0 0
        %1274 = vmatpush1.bf16.msra.mxu0 0
        %1275 = vmatprep.mubr.bf16.mxu0 0
        %1276 = vmatmul.mubr.bf16.gmra.mrb[0].mxu0 %v1226
        %v1277 = vpop.f32.mrb[0].mxu0
        %v1278 = vadd.f32 0.0, %v1277
        %v1279 = vpop.f32.mrb[0].mxu0
        %v1280 = vpop.f32.mrb[0].mxu0
        %v1281 = vadd.f32 0.0, %v1280
        %v1282 = vpop.f32.mrb[0].mxu0
        %1283 = vmatprep.mubr.bf16.mxu0 0
        %1284 = vmatmul.mubr.bf16.gmra.mrb[0].mxu0 %v1229
        %v1285 = vpop.f32.mrb[0].mxu0
        %v1286 = vadd.f32 0.0, %v1285
        %v1287 = vpop.f32.mrb[0].mxu0
        %v1288 = vpop.f32.mrb[0].mxu0
        %v1289 = vadd.f32 0.0, %v1288
        %v1290 = vpop.f32.mrb[0].mxu0
        %1291 = vmatprep.mubr.bf16.mxu0 0
        %1292 = vmatmul.mubr.bf16.gmra.mrb[0].mxu0 %v1232
        %v1293 = vpop.f32.mrb[0].mxu0
        %v1294 = vadd.f32 0.0, %v1293
        %v1295 = vpop.f32.mrb[0].mxu0
        %v1296 = vpop.f32.mrb[0].mxu0
        %v1297 = vadd.f32 0.0, %v1296
        %v1298 = vpop.f32.mrb[0].mxu0
        %1299 = vmatprep.mubr.bf16.mxu0 0
        %1300 = vmatmul.mubr.bf16.gmra.mrb[0].mxu0 %v1235
        %v1301 = vpop.f32.mrb[0].mxu0
        %v1302 = vadd.f32 0.0, %v1301
        %v1303 = vpop.f32.mrb[0].mxu0
        %v1304 = vpop.f32.mrb[0].mxu0
        %v1305 = vadd.f32 0.0, %v1304
        %v1306 = vpop.f32.mrb[0].mxu0
        %1307 = vmatprep.mubr.bf16.mxu0 0
        %1308 = vmatmul.mubr.bf16.gmra.mrb[0].mxu0 %v1238
        %v1309 = vpop.f32.mrb[0].mxu0
        %v1310 = vadd.f32 0.0, %v1309
        %v1311 = vpop.f32.mrb[0].mxu0
        %v1312 = vpop.f32.mrb[0].mxu0
        %v1313 = vpop.f32.mrb[0].mxu0
        %1314 = vdwg.mxu0
        %v1315 = vadd.f32 %v1140, %v1278
        %v1316 = vadd.f32 %v1141, %v1281
        %v1317 = vadd.f32 %v1142, %v1286
        %v1318 = vadd.f32 %v1143, %v1289
        %v1319 = vadd.f32 %v1144, %v1294
        %v1320 = vadd.f32 %v1145, %v1297
        %v1321 = vadd.f32 %v1146, %v1302
        %v1322 = vadd.f32 %v1147, %v1305
        %v1323 = vadd.f32 %v1148, %v1310
        %v1324 = vld [vmem:[%s396 + $0x4] sm:$0xf]
        %v1325 = vld [vmem:[%s396 + $0x8] sm:$0xf]
        %v1326 = vld [vmem:[%s396 + $0xc] sm:$0xf]
        %v1327 = vld [vmem:[%s396 + $0x10] sm:$0xf]
        %v1328 = vld [vmem:[%s396 + $0x14] sm:$0xf]
        %v1329 = vld [vmem:[%s396 + $0x18] sm:$0xf]
        %v1330 = vld [vmem:[%s396 + $0x1c] sm:$0xf]
        %v1331 = vld [vmem:[%s396 + $0x20] sm:$0xf]
        %v1332 = vld [vmem:[%s396 + $0x24] sm:$0xf]
        %v1333 = vld [vmem:[%s396 + $0x28] sm:$0x1]
        %s1334 = scalar_lea.vmem %s1, 14
        %v1335 = vld [vmem:[%s1334] sm:$0x3]
        %v1346 = vunpack.c.l.b16 %v1324
        %v1347 = vunpack.c.l.b16 %v1325
        %v1348 = vunpack.c.l.b16 %v1326
        %v1349 = vunpack.c.l.b16 %v1327
        %v1350 = vunpack.c.l.b16 %v1328
        %v1351 = vunpack.c.l.b16 %v1329
        %v1352 = vunpack.c.l.b16 %v1330
        %v1353 = vunpack.c.l.b16 %v1331
        %v1354 = vunpack.c.l.b16 %v1332
        %v1355 = vunpack.c.l.b16 %v1333
        %v1356 = vpack.c.b16 %v1347, %v1346
        %v1357 = vpack.c.b16 %v1349, %v1348
        %v1358 = vpack.c.b16 %v1351, %v1350
        %v1359 = vpack.c.b16 %v1353, %v1352
        %v1360 = vpack.c.b16 %v1355, %v1354
        %v1362 = vshrl.u32 %v1356, 16
        %v1364 = vshll.u32 %v1356, 16
        %v1366 = vrot.slane %v1364, 1
        %v1367 = vor.u32 %v1362, %v1366
        %v1369 = vshll.u32 %v1357, 16
        %v1371 = vrot.slane %v1369, 1
        %v1372 = vsel %vm567, %v1367, %v1371
        %v1373 = vshrl.u32 %v1357, 16
        %v1375 = vor.u32 %v1373, %v1371
        %v1377 = vshll.u32 %v1358, 16
        %v1379 = vrot.slane %v1377, 1
        %v1380 = vsel %vm567, %v1375, %v1379
        %v1381 = vshrl.u32 %v1358, 16
        %v1383 = vor.u32 %v1381, %v1379
        %v1385 = vshll.u32 %v1359, 16
        %v1387 = vrot.slane %v1385, 1
        %v1388 = vsel %vm567, %v1383, %v1387
        %v1389 = vshrl.u32 %v1359, 16
        %v1391 = vor.u32 %v1389, %v1387
        %v1393 = vshll.u32 %v1360, 16
        %v1395 = vrot.slane %v1393, 1
        %v1396 = vsel %vm567, %v1391, %v1395
        %v1397 = vshrl.u32 %v1360, 16
        %v1399 = vor.u32 %v1397, %v1395
        %v1401 = vsel %vm295, %v1372, 0
        %v1404 = vsel %vm295, %v1380, 0
        %v1407 = vsel %vm295, %v1388, 0
        %v1410 = vsel %vm295, %v1396, 0
        %v1413 = vsel %vm295, %v1399, 0
        %v1416 = vsel %vm311, %v1335, 0
        %1418 = vmatprep.subr.bf16.mxu0 0
        %1419 = vmatpush1.bf16.msra.mxu0 %v1416
        %1420 = vmatprep.subr.bf16.mxu0 0
        %1421 = vmatpush1.bf16.msra.mxu0 0
        %1422 = vmatprep.subr.bf16.mxu0 0
        %1423 = vmatpush1.bf16.msra.mxu0 0
        %1424 = vmatprep.subr.bf16.mxu0 0
        %1425 = vmatpush1.bf16.msra.mxu0 0
        %1426 = vmatprep.subr.bf16.mxu0 0
        %1427 = vmatpush1.bf16.msra.mxu0 0
        %1428 = vmatprep.subr.bf16.mxu0 0
        %1429 = vmatpush1.bf16.msra.mxu0 0
        %1430 = vmatprep.subr.bf16.mxu0 0
        %1431 = vmatpush1.bf16.msra.mxu0 0
        %1432 = vmatprep.subr.bf16.mxu0 0
        %1433 = vmatpush1.bf16.msra.mxu0 0
        %1434 = vmatprep.subr.bf16.mxu0 0
        %1435 = vmatpush1.bf16.msra.mxu0 0
        %1436 = vmatprep.subr.bf16.mxu0 0
        %1437 = vmatpush1.bf16.msra.mxu0 0
        %1438 = vmatprep.subr.bf16.mxu0 0
        %1439 = vmatpush1.bf16.msra.mxu0 0
        %1440 = vmatprep.subr.bf16.mxu0 0
        %1441 = vmatpush1.bf16.msra.mxu0 0
        %1442 = vmatprep.subr.bf16.mxu0 0
        %1443 = vmatpush1.bf16.msra.mxu0 0
        %1444 = vmatprep.subr.bf16.mxu0 0
        %1445 = vmatpush1.bf16.msra.mxu0 0
        %1446 = vmatprep.subr.bf16.mxu0 0
        %1447 = vmatpush1.bf16.msra.mxu0 0
        %1448 = vmatprep.subr.bf16.mxu0 0
        %1449 = vmatpush1.bf16.msra.mxu0 0
        %1450 = vmatprep.mubr.bf16.mxu0 0
        %1451 = vmatmul.mubr.bf16.gmra.mrb[0].mxu0 %v1401
        %v1452 = vpop.f32.mrb[0].mxu0
        %v1453 = vadd.f32 0.0, %v1452
        %v1454 = vpop.f32.mrb[0].mxu0
        %v1455 = vpop.f32.mrb[0].mxu0
        %v1456 = vadd.f32 0.0, %v1455
        %v1457 = vpop.f32.mrb[0].mxu0
        %1458 = vmatprep.mubr.bf16.mxu0 0
        %1459 = vmatmul.mubr.bf16.gmra.mrb[0].mxu0 %v1404
        %v1460 = vpop.f32.mrb[0].mxu0
        %v1461 = vadd.f32 0.0, %v1460
        %v1462 = vpop.f32.mrb[0].mxu0
        %v1463 = vpop.f32.mrb[0].mxu0
        %v1464 = vadd.f32 0.0, %v1463
        %v1465 = vpop.f32.mrb[0].mxu0
        %1466 = vmatprep.mubr.bf16.mxu0 0
        %1467 = vmatmul.mubr.bf16.gmra.mrb[0].mxu0 %v1407
        %v1468 = vpop.f32.mrb[0].mxu0
        %v1469 = vadd.f32 0.0, %v1468
        %v1470 = vpop.f32.mrb[0].mxu0
        %v1471 = vpop.f32.mrb[0].mxu0
        %v1472 = vadd.f32 0.0, %v1471
        %v1473 = vpop.f32.mrb[0].mxu0
        %1474 = vmatprep.mubr.bf16.mxu0 0
        %1475 = vmatmul.mubr.bf16.gmra.mrb[0].mxu0 %v1410
        %v1476 = vpop.f32.mrb[0].mxu0
        %v1477 = vadd.f32 0.0, %v1476
        %v1478 = vpop.f32.mrb[0].mxu0
        %v1479 = vpop.f32.mrb[0].mxu0
        %v1480 = vadd.f32 0.0, %v1479
        %v1481 = vpop.f32.mrb[0].mxu0
        %1482 = vmatprep.mubr.bf16.mxu0 0
        %1483 = vmatmul.mubr.bf16.gmra.mrb[0].mxu0 %v1413
        %v1484 = vpop.f32.mrb[0].mxu0
        %v1485 = vadd.f32 0.0, %v1484
        %v1486 = vpop.f32.mrb[0].mxu0
        %v1487 = vpop.f32.mrb[0].mxu0
        %v1488 = vpop.f32.mrb[0].mxu0
        %1489 = vdwg.mxu0
        %v1490 = vadd.f32 %v1315, %v1453
        %v1491 = vadd.f32 %v1316, %v1456
        %v1492 = vadd.f32 %v1317, %v1461
        %v1493 = vadd.f32 %v1318, %v1464
        %v1494 = vadd.f32 %v1319, %v1469
        %v1495 = vadd.f32 %v1320, %v1472
        %v1496 = vadd.f32 %v1321, %v1477
        %v1497 = vadd.f32 %v1322, %v1480
        %v1498 = vadd.f32 %v1323, %v1485
        %v1499 = vld [vmem:[%s248 + $0x4] sm:$0xe]
        %s1500 = scalar_lea.vmem %s1, 16
        %v1501 = vld [vmem:[%s1500] sm:$0x3]
        %v1503 = vunpack.c.l.b16 %v1499
        %v1504 = vpack.c.b16 %v1172, %v1503
        %vm1505 = vcmask 1046528
        %v1506 = vrot.slane %v1504, 1
        %v1507 = vrot.slane %v1182, 1
        %v1508 = vsel %vm1505, %v1506, %v1507
        %v1509 = vrot.slane %v1183, 1
        %v1510 = vsel %vm1505, %v1507, %v1509
        %v1511 = vrot.slane %v1184, 1
        %v1512 = vsel %vm1505, %v1509, %v1511
        %v1513 = vrot.slane %v1185, 1
        %v1514 = vsel %vm1505, %v1511, %v1513
        %v1516 = vsel %vm295, %v1508, 0
        %v1519 = vsel %vm295, %v1510, 0
        %v1522 = vsel %vm295, %v1512, 0
        %v1525 = vsel %vm295, %v1514, 0
        %v1528 = vsel %vm295, %v1513, 0
        %v1531 = vsel %vm311, %v1501, 0
        %1533 = vmatprep.subr.bf16.mxu0 0
        %1534 = vmatpush1.bf16.msra.mxu0 %v1531
        %1535 = vmatprep.subr.bf16.mxu0 0
        %1536 = vmatpush1.bf16.msra.mxu0 0
        %1537 = vmatprep.subr.bf16.mxu0 0
        %1538 = vmatpush1.bf16.msra.mxu0 0
        %1539 = vmatprep.subr.bf16.mxu0 0
        %1540 = vmatpush1.bf16.msra.mxu0 0
        %1541 = vmatprep.subr.bf16.mxu0 0
        %1542 = vmatpush1.bf16.msra.mxu0 0
        %1543 = vmatprep.subr.bf16.mxu0 0
        %1544 = vmatpush1.bf16.msra.mxu0 0
        %1545 = vmatprep.subr.bf16.mxu0 0
        %1546 = vmatpush1.bf16.msra.mxu0 0
        %1547 = vmatprep.subr.bf16.mxu0 0
        %1548 = vmatpush1.bf16.msra.mxu0 0
        %1549 = vmatprep.subr.bf16.mxu0 0
        %1550 = vmatpush1.bf16.msra.mxu0 0
        %1551 = vmatprep.subr.bf16.mxu0 0
        %1552 = vmatpush1.bf16.msra.mxu0 0
        %1553 = vmatprep.subr.bf16.mxu0 0
        %1554 = vmatpush1.bf16.msra.mxu0 0
        %1555 = vmatprep.subr.bf16.mxu0 0
        %1556 = vmatpush1.bf16.msra.mxu0 0
        %1557 = vmatprep.subr.bf16.mxu0 0
        %1558 = vmatpush1.bf16.msra.mxu0 0
        %1559 = vmatprep.subr.bf16.mxu0 0
        %1560 = vmatpush1.bf16.msra.mxu0 0
        %1561 = vmatprep.subr.bf16.mxu0 0
        %1562 = vmatpush1.bf16.msra.mxu0 0
        %1563 = vmatprep.subr.bf16.mxu0 0
        %1564 = vmatpush1.bf16.msra.mxu0 0
        %1565 = vmatprep.mubr.bf16.mxu0 0
        %1566 = vmatmul.mubr.bf16.gmra.mrb[0].mxu0 %v1516
        %v1567 = vpop.f32.mrb[0].mxu0
        %v1568 = vadd.f32 0.0, %v1567
        %v1569 = vpop.f32.mrb[0].mxu0
        %v1570 = vpop.f32.mrb[0].mxu0
        %v1571 = vadd.f32 0.0, %v1570
        %v1572 = vpop.f32.mrb[0].mxu0
        %1573 = vmatprep.mubr.bf16.mxu0 0
        %1574 = vmatmul.mubr.bf16.gmra.mrb[0].mxu0 %v1519
        %v1575 = vpop.f32.mrb[0].mxu0
        %v1576 = vadd.f32 0.0, %v1575
        %v1577 = vpop.f32.mrb[0].mxu0
        %v1578 = vpop.f32.mrb[0].mxu0
        %v1579 = vadd.f32 0.0, %v1578
        %v1580 = vpop.f32.mrb[0].mxu0
        %1581 = vmatprep.mubr.bf16.mxu0 0
        %1582 = vmatmul.mubr.bf16.gmra.mrb[0].mxu0 %v1522
        %v1583 = vpop.f32.mrb[0].mxu0
        %v1584 = vadd.f32 0.0, %v1583
        %v1585 = vpop.f32.mrb[0].mxu0
        %v1586 = vpop.f32.mrb[0].mxu0
        %v1587 = vadd.f32 0.0, %v1586
        %v1588 = vpop.f32.mrb[0].mxu0
        %1589 = vmatprep.mubr.bf16.mxu0 0
        %1590 = vmatmul.mubr.bf16.gmra.mrb[0].mxu0 %v1525
        %v1591 = vpop.f32.mrb[0].mxu0
        %v1592 = vadd.f32 0.0, %v1591
        %v1593 = vpop.f32.mrb[0].mxu0
        %v1594 = vpop.f32.mrb[0].mxu0
        %v1595 = vadd.f32 0.0, %v1594
        %v1596 = vpop.f32.mrb[0].mxu0
        %1597 = vmatprep.mubr.bf16.mxu0 0
        %1598 = vmatmul.mubr.bf16.gmra.mrb[0].mxu0 %v1528
        %v1599 = vpop.f32.mrb[0].mxu0
        %v1600 = vadd.f32 0.0, %v1599
        %v1601 = vpop.f32.mrb[0].mxu0
        %v1602 = vpop.f32.mrb[0].mxu0
        %v1603 = vpop.f32.mrb[0].mxu0
        %1604 = vdwg.mxu0
        %v1605 = vadd.f32 %v1490, %v1568
        %v1606 = vadd.f32 %v1491, %v1571
        %v1607 = vadd.f32 %v1492, %v1576
        %v1608 = vadd.f32 %v1493, %v1579
        %v1609 = vadd.f32 %v1494, %v1584
        %v1610 = vadd.f32 %v1495, %v1587
        %v1611 = vadd.f32 %v1496, %v1592
        %v1612 = vadd.f32 %v1497, %v1595
        %v1613 = vadd.f32 %v1498, %v1600
        %1614 = vst [vmem:[%s236] sm:$0xff] %v1605
        %1615 = vst [vmem:[%s236 + $0x8] sm:$0xff] %v1606
        %1616 = vst [vmem:[%s236 + $0x10] sm:$0xff] %v1607
        %1617 = vst [vmem:[%s236 + $0x18] sm:$0xff] %v1608
        %1618 = vst [vmem:[%s236 + $0x20] sm:$0xff] %v1609
        %1619 = vst [vmem:[%s236 + $0x28] sm:$0xff] %v1610
        %1620 = vst [vmem:[%s236 + $0x30] sm:$0xff] %v1611
        %1621 = vst [vmem:[%s236 + $0x38] sm:$0xff] %v1612
        %1622 = vst [vmem:[%s236 + $0x40] sm:$0xff] %v1613
        %v1623 = vld [vmem:[%s253] sm:$0xff]
        %vm1624 = vcmask 64512
        %1625 = vst.msk [vmem:[%s243] sm:$0xff] %vm1624, %v1623
        %s1626 = sand.u32 %s125, 1
        %s1627 = scalar_lea.sflag [#allocation3], %s1626
        %s1628 = sand.u32 %s125, 1
        %s1629 = smul.addr %s1628, 72
        %s1630 = scalar_lea.vmem [#allocation2], %s1629
        %s1631 = sand.u32 %s151, 1
        %s1632 = scalar_lea.sflag [#allocation5], %s1631
        %s1633 = sand.u32 %s151, 1
        %s1634 = smul.addr %s1633, 8
        %s1635 = scalar_lea.vmem [#allocation4], %s1634
        // Predicated region
        $region37: #{tpu_custom_call.1} parent=35 // pred_check
          %p1636 = pneg %p135
        $region38: #{tpu_custom_call.1} parent=35 // pred_check_branch
          %1638 = sbr.rel (%p1636) target = $region40
        $region39: #{tpu_custom_call.1} parent=35 // pred_region
          %s1640 = ssub.s32 1152, 1152
          %1641 = vsyncadd %s1627, %s1640
          %s1642 = smul.addr %s23, 9
          %s1643 = smul.addr %s1642, 128
          %s1644 = scalar_lea.hbm %s4, %s1643
          %s1645 = sshll.u32 %s1630, 4
          %s1646 = int_to_ptr.vmem [resolvable:$true] %s1645
          %1651 = dma.vmem_to_hbm [thread:$0]  %s1646, 1152, %s1644, %s1627, 128, 128, 8
        $region40: #{tpu_custom_call.1} parent=35 // pred_fallthru
          _
        // Predicated region
        $region41: #{tpu_custom_call.1} parent=35 // pred_check
          %p1652 = pneg %p161
        $region42: #{tpu_custom_call.1} parent=35 // pred_check_branch
          %1654 = sbr.rel (%p1652) target = $region44
        $region43: #{tpu_custom_call.1} parent=35 // pred_region
          %s1656 = ssub.s32 128, 128
          %1657 = vsyncadd %s1632, %s1656
          %s1658 = smul.addr %s23, 128
          %s1659 = scalar_lea.hbm %s5, %s1658
          %s1661 = sshll.u32 %s1635, 4
          %s1662 = int_to_ptr.vmem [resolvable:$true] %s1661
          %1664 = dma.vmem_to_hbm [thread:$0]  %s1662, 128, %s1659, %s1632
        $region44: #{tpu_custom_call.1} parent=35 // pred_fallthru
          _
      $region36: #{tpu_custom_call.1} parent=5 // pred_fallthru
        _
      %p1665 = scmp.le.s32.totalorder 2, %s18
      // Predicated region
      $region45: #{tpu_custom_call.1} parent=5 // pred_check
        %p1666 = pneg %p1665
      $region46: #{tpu_custom_call.1} parent=5 // pred_check_branch
        %1668 = sbr.rel (%p1666) target = $region48
      $region47: #{tpu_custom_call.1} parent=5 // pred_region
        %s1669 = ssub.s32 %s18, 2
        // Predicated region
        $region49: #{tpu_custom_call.1} parent=47 // pred_check
          %p1670 = pneg %p141
        $region50: #{tpu_custom_call.1} parent=47 // pred_check_branch
          %1672 = sbr.rel (%p1670) target = $region52
        $region51: #{tpu_custom_call.1} parent=47 // pred_region
          %s1673 = sand.u32 %s126, 1
          %s1674 = scalar_lea.sflag [#allocation3], %s1673
          %s1675 = sand.u32 %s126, 1
          %s1676 = smul.addr %s1675, 72
          %s1677 = scalar_lea.vmem [#allocation2], %s1676
          %1678 = dma.done %s1674, 1152
        $region52: #{tpu_custom_call.1} parent=47 // pred_fallthru
          _
        // Predicated region
        $region53: #{tpu_custom_call.1} parent=47 // pred_check
          %p1679 = pneg %p167
        $region54: #{tpu_custom_call.1} parent=47 // pred_check_branch
          %1681 = sbr.rel (%p1679) target = $region56
        $region55: #{tpu_custom_call.1} parent=47 // pred_region
          %s1682 = sand.u32 %s152, 1
          %s1683 = scalar_lea.sflag [#allocation5], %s1682
          %s1684 = sand.u32 %s152, 1
          %s1685 = smul.addr %s1684, 8
          %s1686 = scalar_lea.vmem [#allocation4], %s1685
          %1687 = dma.done %s1683, 128
        $region56: #{tpu_custom_call.1} parent=47 // pred_fallthru
          _
      $region48: #{tpu_custom_call.1} parent=5 // pred_fallthru
        _
    $region6: #{tpu_custom_call.1} parent=1 // loop_footer
      %s22 = sadd.s32 1, %s18
    $region7: #{tpu_custom_call.1} parent=1 // loop_footer_branch
      %17 = sbr.rel target = $region3
    $region8: #{tpu_custom_call.1} parent=1 // loop_exit
      _
    %1688 = vsyncpa [#allocation3], 1
    %s1689 = scalar_lea.sflag [#allocation3], 1
    %1690 = vsyncpa %s1689, 1
    %1691 = vsyncpa [#allocation5], 1
    %s1692 = scalar_lea.sflag [#allocation5], 1
    %1693 = vsyncpa %s1692, 1

</llo_original>
